<compile_context>
chip_gen: v5e
topology: v5e:2x2
jax: 0.10.0
libtpu: 0.0.40
codegen_flags: <defaults>
</compile_context>

<pallas_src>
import functools
import math

import jax
import jax.numpy as jnp
from jax.experimental import pallas as pl
from jax.experimental.pallas import tpu as pltpu


def attention_layer_kernel(
    q_ref,        # (1, TL, D)
    k_ref,        # (1, S,  D)   resident per batch
    v_ref,        # (1, S,  D)   resident per batch
    wq_ref,       # (D, H*dk)    pre-transposed
    bq_ref,       # (1, H*dk)
    wk_ref,       # (D, H*dk)
    bk_ref,       # (1, H*dk)
    wv_ref,       # (D, H*dv)
    bv_ref,       # (1, H*dv)
    wo_ref,       # (H*dv, D)    pre-transposed
    bo_ref,       # (1, D)
    o_ref,        # (1, TL, D)
    kp_ref,       # VMEM scratch (S, H*dk) f32 — cached K projection
    vp_ref,       # VMEM scratch (S, H*dv) f32 — cached V projection
    *,
    n_heads: int,
    d_keys: int,
    d_values: int,
    scale: float,
):
    H, dk, dv = n_heads, d_keys, d_values

    # K/V projections: compute once per batch (first L tile), reuse across tiles.
    @pl.when(pl.program_id(1) == 0)
    def _():
        k_in = k_ref[0].astype(jnp.float32)                       # (S, D)
        v_in = v_ref[0].astype(jnp.float32)                       # (S, D)
        kp_ref[...] = (jnp.dot(k_in, wk_ref[...],
                               preferred_element_type=jnp.float32)
                       + bk_ref[...])                             # (S, H*dk)
        vp_ref[...] = (jnp.dot(v_in, wv_ref[...],
                               preferred_element_type=jnp.float32)
                       + bv_ref[...])                             # (S, H*dv)

    q_in = q_ref[0].astype(jnp.float32)                           # (TL, D)
    qp = (jnp.dot(q_in, wq_ref[...], preferred_element_type=jnp.float32)
          + bq_ref[...])                                          # (TL, H*dk)
    kp = kp_ref[...]                                              # (S, H*dk)
    vp = vp_ref[...]                                              # (S, H*dv)

    # Per-head scaled dot-product attention (static unroll over heads).
    ctx_parts = []
    for h in range(H):
        qh = qp[:, h * dk:(h + 1) * dk]                           # (TL, dk)
        kh = kp[:, h * dk:(h + 1) * dk]                           # (S, dk)
        vh = vp[:, h * dv:(h + 1) * dv]                           # (S, dv)
        # q @ k^T without an explicit transpose (contract the dk axes).
        s = jax.lax.dot_general(qh, kh, (((1,), (1,)), ((), ())),
                                preferred_element_type=jnp.float32) * scale  # (TL, S)
        s = s - jnp.max(s, axis=-1, keepdims=True)
        p = jnp.exp(s)
        denom = jnp.sum(p, axis=-1, keepdims=True)
        p = p * pl.reciprocal(denom, approx=True)                 # EUP slot, ~free
        ctx_parts.append(jnp.dot(p, vh, preferred_element_type=jnp.float32))  # (TL, dv)

    # Concatenate head contexts -> one full-width out-projection matmul.
    ctx = jnp.concatenate(ctx_parts, axis=-1)                     # (TL, H*dv)
    out = (jnp.dot(ctx, wo_ref[...], preferred_element_type=jnp.float32)
           + bo_ref[...])                                         # (TL, D)
    o_ref[0] = out.astype(o_ref.dtype)


def init_params(key, d_model, n_heads, d_keys=None, d_values=None):
    """PyTorch nn.Linear-style deterministic init (uniform +-1/sqrt(fan_in))."""
    d_keys = d_keys or d_model // n_heads
    d_values = d_values or d_model // n_heads
    ks = jax.random.split(key, 8)

    def linear(kw, kb, out_f, in_f):
        bound = 1.0 / math.sqrt(in_f)
        w = jax.random.uniform(kw, (out_f, in_f), jnp.float32, -bound, bound)
        b = jax.random.uniform(kb, (out_f,), jnp.float32, -bound, bound)
        return w, b

    w_q, b_q = linear(ks[0], ks[1], d_keys * n_heads, d_model)
    w_k, b_k = linear(ks[2], ks[3], d_keys * n_heads, d_model)
    w_v, b_v = linear(ks[4], ks[5], d_values * n_heads, d_model)
    w_o, b_o = linear(ks[6], ks[7], d_model, d_values * n_heads)
    return dict(w_q=w_q, b_q=b_q, w_k=w_k, b_k=b_k,
                w_v=w_v, b_v=b_v, w_o=w_o, b_o=b_o)


def prepare_params(params):
    """One-time host-side weight prep (pre-transpose, bias rows); reuse across calls."""
    f32 = jnp.float32
    return dict(
        w_q=params["w_q"].T.astype(f32),           # (D, H*dk)
        b_q=params["b_q"][None, :].astype(f32),    # (1, H*dk)
        w_k=params["w_k"].T.astype(f32),           # (D, H*dk)
        b_k=params["b_k"][None, :].astype(f32),    # (1, H*dk)
        w_v=params["w_v"].T.astype(f32),           # (D, H*dv)
        b_v=params["b_v"][None, :].astype(f32),    # (1, H*dv)
        w_o=params["w_o"].T.astype(f32),           # (H*dv, D)
        b_o=params["b_o"][None, :].astype(f32),    # (1, D)
    )


def attention_layer(queries, keys, values, prepped, *, n_heads, d_keys, d_values,
                    attn_mask=None, mix=False, block_l=128):
    # TODO(synk): attn_mask / mix=True depend on the unspecified inner_attention
    # module; unmasked FullAttention with mix=False is implemented here.
    del attn_mask
    assert not mix, "mix=True head-interleave path not implemented"

    B, L, D = queries.shape
    _, S, _ = keys.shape
    H = n_heads
    nq = H * d_keys
    nv = H * d_values

    TL = block_l if (L % block_l == 0) else L
    grid = (B, L // TL)

    kernel = functools.partial(
        attention_layer_kernel,
        n_heads=H, d_keys=d_keys, d_values=d_values,
        scale=1.0 / math.sqrt(d_keys),
    )

    out = pl.pallas_call(
        kernel,
        out_shape=jax.ShapeDtypeStruct((B, L, D), queries.dtype),
        grid_spec=pltpu.PrefetchScalarGridSpec(
            num_scalar_prefetch=0,
            grid=grid,
            in_specs=[
                pl.BlockSpec((1, TL, D), lambda b, l: (b, l, 0)),     # queries tile
                pl.BlockSpec((1, S, D), lambda b, l: (b, 0, 0)),      # keys (resident per b)
                pl.BlockSpec((1, S, D), lambda b, l: (b, 0, 0)),      # values (resident per b)
                pl.BlockSpec((D, nq), lambda b, l: (0, 0)),           # Wq^T
                pl.BlockSpec((1, nq), lambda b, l: (0, 0)),           # bq
                pl.BlockSpec((D, nq), lambda b, l: (0, 0)),           # Wk^T
                pl.BlockSpec((1, nq), lambda b, l: (0, 0)),           # bk
                pl.BlockSpec((D, nv), lambda b, l: (0, 0)),           # Wv^T
                pl.BlockSpec((1, nv), lambda b, l: (0, 0)),           # bv
                pl.BlockSpec((nv, D), lambda b, l: (0, 0)),           # Wo^T
                pl.BlockSpec((1, D), lambda b, l: (0, 0)),            # bo
            ],
            out_specs=pl.BlockSpec((1, TL, D), lambda b, l: (b, l, 0)),
            scratch_shapes=[
                pltpu.VMEM((S, nq), jnp.float32),    # cached K projection
                pltpu.VMEM((S, nv), jnp.float32),    # cached V projection
            ],
        ),
        compiler_params=pltpu.CompilerParams(
            # L axis carries the cached-K/V-projection scratch dependency -> arbitrary.
            dimension_semantics=("parallel", "arbitrary"),
        ),
    )(queries, keys, values,
      prepped["w_q"], prepped["b_q"], prepped["w_k"], prepped["b_k"],
      prepped["w_v"], prepped["b_v"], prepped["w_o"], prepped["b_o"])

    return out, None   # attn is None (FullAttention, output_attention=False)


def attention_layer_ref(queries, keys, values, params, *, n_heads):
    """Pure-JAX reference of the PyTorch forward (mix=False, no mask)."""
    B, L, D = queries.shape
    _, S, _ = keys.shape
    H = n_heads
    q = queries @ params["w_q"].T + params["b_q"]
    k = keys @ params["w_k"].T + params["b_k"]
    v = values @ params["w_v"].T + params["b_v"]
    dk = q.shape[-1] // H
    dv = v.shape[-1] // H
    q = q.reshape(B, L, H, dk)
    k = k.reshape(B, S, H, dk)
    v = v.reshape(B, S, H, dv)
    scores = jnp.einsum("blhe,bshe->bhls", q, k) / jnp.sqrt(jnp.float32(dk))
    a = jax.nn.softmax(scores, axis=-1)
    out = jnp.einsum("bhls,bshd->blhd", a, v).reshape(B, L, H * dv)
    return out @ params["w_o"].T + params["b_o"]


if __name__ == "__main__":
    # Small, module-consistent shapes: batch=2, seq=16, d_model=32, 4 heads (dk=dv=8).
    B, L, S = 2, 16, 16
    d_model, n_heads = 32, 4
    d_keys = d_values = d_model // n_heads

    key = jax.random.PRNGKey(0)
    kq, kk, kv, kp = jax.random.split(key, 4)
    queries = jax.random.normal(kq, (B, L, d_model), jnp.float32)
    keys = jax.random.normal(kk, (B, S, d_model), jnp.float32)
    values = jax.random.normal(kv, (B, S, d_model), jnp.float32)

    params = init_params(kp, d_model, n_heads)
    prepped = prepare_params(params)   # one-time weight bundle, reused across calls

    out, attn = attention_layer(queries, keys, values, prepped,
                                n_heads=n_heads, d_keys=d_keys, d_values=d_values)
    out = jax.block_until_ready(out)

    ref = attention_layer_ref(queries, keys, values, params, n_heads=n_heads)
    assert out.shape == ref.shape, (out.shape, ref.shape)
    max_err = float(jnp.max(jnp.abs(out - ref)))
    # Loose-ish tolerance because the softmax denominator uses the EUP approx reciprocal.
    assert max_err < 5e-3, max_err

    print("KERNEL_OK")
</pallas_src>

<mosaic_0001>
module attributes {stable_mosaic.version = 11 : i64} {
  func.func @attention_layer_kernel(%arg0: i32, %arg1: i32, %arg2: memref<1x16x32xf32, #tpu.memory_space<vmem>>, %arg3: memref<1x16x32xf32, #tpu.memory_space<vmem>>, %arg4: memref<1x16x32xf32, #tpu.memory_space<vmem>>, %arg5: memref<32x32xf32, #tpu.memory_space<vmem>>, %arg6: memref<1x32xf32, #tpu.memory_space<vmem>>, %arg7: memref<32x32xf32, #tpu.memory_space<vmem>>, %arg8: memref<1x32xf32, #tpu.memory_space<vmem>>, %arg9: memref<32x32xf32, #tpu.memory_space<vmem>>, %arg10: memref<1x32xf32, #tpu.memory_space<vmem>>, %arg11: memref<32x32xf32, #tpu.memory_space<vmem>>, %arg12: memref<1x32xf32, #tpu.memory_space<vmem>>, %arg13: memref<1x16x32xf32, #tpu.memory_space<vmem>>, %arg14: memref<16x32xf32, #tpu.memory_space<vmem>>, %arg15: memref<16x32xf32, #tpu.memory_space<vmem>>) attributes {dimension_semantics = [#tpu.dimension_semantics<parallel>, #tpu.dimension_semantics<arbitrary>], iteration_bounds = array<i64: 2, 1>, scalar_prefetch = 0 : i64, scratch_operands = 2 : i64, tpu.core_type = #tpu.core_type<tc>, window_params = [{transform_indices = @transform_0, window_bounds = array<i64: 1, 16, 32>}, {transform_indices = @transform_1, window_bounds = array<i64: 1, 16, 32>}, {transform_indices = @transform_2, window_bounds = array<i64: 1, 16, 32>}, {pipeline_mode = #tpu.pipeline_mode<synchronous>, transform_indices = @transform_3, window_bounds = array<i64: 32, 32>}, {pipeline_mode = #tpu.pipeline_mode<synchronous>, transform_indices = @transform_4, window_bounds = array<i64: 1, 32>}, {pipeline_mode = #tpu.pipeline_mode<synchronous>, transform_indices = @transform_5, window_bounds = array<i64: 32, 32>}, {pipeline_mode = #tpu.pipeline_mode<synchronous>, transform_indices = @transform_6, window_bounds = array<i64: 1, 32>}, {pipeline_mode = #tpu.pipeline_mode<synchronous>, transform_indices = @transform_7, window_bounds = array<i64: 32, 32>}, {pipeline_mode = #tpu.pipeline_mode<synchronous>, transform_indices = @transform_8, window_bounds = array<i64: 1, 32>}, {pipeline_mode = #tpu.pipeline_mode<synchronous>, transform_indices = @transform_9, window_bounds = array<i64: 32, 32>}, {pipeline_mode = #tpu.pipeline_mode<synchronous>, transform_indices = @transform_10, window_bounds = array<i64: 1, 32>}, {transform_indices = @transform_11, window_bounds = array<i64: 1, 16, 32>}]} {
    %c0_i32 = arith.constant 0 : i32
    %0 = arith.cmpi eq, %arg1, %c0_i32 : i32
    %1 = arith.extui %0 : i1 to i32
    %c0_i32_0 = arith.constant 0 : i32
    %2 = arith.cmpi ne, %1, %c0_i32_0 : i32
    scf.if %2 {
      %c0_39 = arith.constant 0 : index
      %c0_40 = arith.constant 0 : index
      %c0_41 = arith.constant 0 : index
      %89 = vector.load %arg3[%c0_39, %c0_40, %c0_41] : memref<1x16x32xf32, #tpu.memory_space<vmem>>, vector<1x16x32xf32>
      %90 = vector.shape_cast %89 : vector<1x16x32xf32> to vector<16x32xf32>
      %c0_42 = arith.constant 0 : index
      %c0_43 = arith.constant 0 : index
      %c0_44 = arith.constant 0 : index
      %91 = vector.load %arg4[%c0_42, %c0_43, %c0_44] : memref<1x16x32xf32, #tpu.memory_space<vmem>>, vector<1x16x32xf32>
      %92 = vector.shape_cast %91 : vector<1x16x32xf32> to vector<16x32xf32>
      %c0_45 = arith.constant 0 : index
      %c0_46 = arith.constant 0 : index
      %93 = vector.load %arg7[%c0_45, %c0_46] : memref<32x32xf32, #tpu.memory_space<vmem>>, vector<32x32xf32>
      %cst_47 = arith.constant dense<0.000000e+00> : vector<16x32xf32>
      %94 = tpu.matmul %90, %93, %cst_47 {dimension_numbers = #tpu.dot_dimension_numbers<[1], [0], [0], [1], [0, 0, 1, 1], [], []>} : vector<16x32xf32>, vector<32x32xf32>, vector<16x32xf32> -> vector<16x32xf32>
      %c0_48 = arith.constant 0 : index
      %c0_49 = arith.constant 0 : index
      %95 = vector.load %arg8[%c0_48, %c0_49] : memref<1x32xf32, #tpu.memory_space<vmem>>, vector<1x32xf32>
      %96 = vector.broadcast %95 : vector<1x32xf32> to vector<16x32xf32>
      %97 = arith.addf %94, %96 : vector<16x32xf32>
      %c0_50 = arith.constant 0 : index
      %c0_51 = arith.constant 0 : index
      %98 = vector.load %arg14[%c0_50, %c0_51] : memref<16x32xf32, #tpu.memory_space<vmem>>, vector<16x32xf32>
      tpu.vector_store %arg14[%c0_50, %c0_51], %97 {strides = array<i32>} : memref<16x32xf32, #tpu.memory_space<vmem>>, vector<16x32xf32>,
      %c0_52 = arith.constant 0 : index
      %c0_53 = arith.constant 0 : index
      %99 = vector.load %arg9[%c0_52, %c0_53] : memref<32x32xf32, #tpu.memory_space<vmem>>, vector<32x32xf32>
      %cst_54 = arith.constant dense<0.000000e+00> : vector<16x32xf32>
      %100 = tpu.matmul %92, %99, %cst_54 {dimension_numbers = #tpu.dot_dimension_numbers<[1], [0], [0], [1], [0, 0, 1, 1], [], []>} : vector<16x32xf32>, vector<32x32xf32>, vector<16x32xf32> -> vector<16x32xf32>
      %c0_55 = arith.constant 0 : index
      %c0_56 = arith.constant 0 : index
      %101 = vector.load %arg10[%c0_55, %c0_56] : memref<1x32xf32, #tpu.memory_space<vmem>>, vector<1x32xf32>
      %102 = vector.broadcast %101 : vector<1x32xf32> to vector<16x32xf32>
      %103 = arith.addf %100, %102 : vector<16x32xf32>
      %c0_57 = arith.constant 0 : index
      %c0_58 = arith.constant 0 : index
      %104 = vector.load %arg15[%c0_57, %c0_58] : memref<16x32xf32, #tpu.memory_space<vmem>>, vector<16x32xf32>
      tpu.vector_store %arg15[%c0_57, %c0_58], %103 {strides = array<i32>} : memref<16x32xf32, #tpu.memory_space<vmem>>, vector<16x32xf32>,
    } else {
    }
    %c0 = arith.constant 0 : index
    %c0_1 = arith.constant 0 : index
    %c0_2 = arith.constant 0 : index
    %3 = vector.load %arg2[%c0, %c0_1, %c0_2] : memref<1x16x32xf32, #tpu.memory_space<vmem>>, vector<1x16x32xf32>
    %4 = vector.shape_cast %3 : vector<1x16x32xf32> to vector<16x32xf32>
    %c0_3 = arith.constant 0 : index
    %c0_4 = arith.constant 0 : index
    %5 = vector.load %arg5[%c0_3, %c0_4] : memref<32x32xf32, #tpu.memory_space<vmem>>, vector<32x32xf32>
    %cst = arith.constant dense<0.000000e+00> : vector<16x32xf32>
    %6 = tpu.matmul %4, %5, %cst {dimension_numbers = #tpu.dot_dimension_numbers<[1], [0], [0], [1], [0, 0, 1, 1], [], []>} : vector<16x32xf32>, vector<32x32xf32>, vector<16x32xf32> -> vector<16x32xf32>
    %c0_5 = arith.constant 0 : index
    %c0_6 = arith.constant 0 : index
    %7 = vector.load %arg6[%c0_5, %c0_6] : memref<1x32xf32, #tpu.memory_space<vmem>>, vector<1x32xf32>
    %8 = vector.broadcast %7 : vector<1x32xf32> to vector<16x32xf32>
    %9 = arith.addf %6, %8 : vector<16x32xf32>
    %c0_7 = arith.constant 0 : index
    %c0_8 = arith.constant 0 : index
    %10 = vector.load %arg14[%c0_7, %c0_8] : memref<16x32xf32, #tpu.memory_space<vmem>>, vector<16x32xf32>
    %c0_9 = arith.constant 0 : index
    %c0_10 = arith.constant 0 : index
    %11 = vector.load %arg15[%c0_9, %c0_10] : memref<16x32xf32, #tpu.memory_space<vmem>>, vector<16x32xf32>
    %12 = vector.extract_strided_slice %9 {offsets = [0, 0], sizes = [16, 8], strides = [1, 1]} : vector<16x32xf32> to vector<16x8xf32>
    %13 = vector.extract_strided_slice %10 {offsets = [0, 0], sizes = [16, 8], strides = [1, 1]} : vector<16x32xf32> to vector<16x8xf32>
    %14 = vector.extract_strided_slice %11 {offsets = [0, 0], sizes = [16, 8], strides = [1, 1]} : vector<16x32xf32> to vector<16x8xf32>
    %cst_11 = arith.constant dense<0.000000e+00> : vector<16x16xf32>
    %15 = tpu.matmul %12, %13, %cst_11 {dimension_numbers = #tpu.dot_dimension_numbers<[1], [1], [0], [0], [0, 0, 1, 0], [], []>} : vector<16x8xf32>, vector<16x8xf32>, vector<16x16xf32> -> vector<16x16xf32>
    %cst_12 = arith.constant 0.353553385 : f32
    %16 = vector.broadcast %cst_12 : f32 to vector<16x16xf32>
    %17 = arith.mulf %15, %16 : vector<16x16xf32>
    %cst_13 = arith.constant dense<0xFF800000> : vector<16xf32>
    %18 = vector.multi_reduction <maximumf>, %17, %cst_13 [1] : vector<16x16xf32> to vector<16xf32>
    %19 = vector.shape_cast %18 : vector<16xf32> to vector<16x1xf32>
    %20 = vector.broadcast %19 : vector<16x1xf32> to vector<16x16xf32>
    %21 = arith.subf %17, %20 : vector<16x16xf32>
    %22 = math.exp %21 : vector<16x16xf32>
    %cst_14 = arith.constant dense<0.000000e+00> : vector<16xf32>
    %23 = vector.multi_reduction <add>, %22, %cst_14 [1] : vector<16x16xf32> to vector<16xf32>
    %24 = vector.shape_cast %23 : vector<16xf32> to vector<16x1xf32>
    %25 = tpu.reciprocal %24 {approx = true} : vector<16x1xf32> -> vector<16x1xf32>
    %26 = vector.broadcast %25 : vector<16x1xf32> to vector<16x16xf32>
    %27 = arith.mulf %22, %26 : vector<16x16xf32>
    %cst_15 = arith.constant dense<0.000000e+00> : vector<16x8xf32>
    %28 = tpu.matmul %27, %14, %cst_15 {dimension_numbers = #tpu.dot_dimension_numbers<[1], [0], [0], [1], [0, 0, 1, 1], [], []>} : vector<16x16xf32>, vector<16x8xf32>, vector<16x8xf32> -> vector<16x8xf32>
    %29 = vector.extract_strided_slice %9 {offsets = [0, 8], sizes = [16, 8], strides = [1, 1]} : vector<16x32xf32> to vector<16x8xf32>
    %30 = vector.extract_strided_slice %10 {offsets = [0, 8], sizes = [16, 8], strides = [1, 1]} : vector<16x32xf32> to vector<16x8xf32>
    %31 = vector.extract_strided_slice %11 {offsets = [0, 8], sizes = [16, 8], strides = [1, 1]} : vector<16x32xf32> to vector<16x8xf32>
    %cst_16 = arith.constant dense<0.000000e+00> : vector<16x16xf32>
    %32 = tpu.matmul %29, %30, %cst_16 {dimension_numbers = #tpu.dot_dimension_numbers<[1], [1], [0], [0], [0, 0, 1, 0], [], []>} : vector<16x8xf32>, vector<16x8xf32>, vector<16x16xf32> -> vector<16x16xf32>
    %cst_17 = arith.constant 0.353553385 : f32
    %33 = vector.broadcast %cst_17 : f32 to vector<16x16xf32>
    %34 = arith.mulf %32, %33 : vector<16x16xf32>
    %cst_18 = arith.constant dense<0xFF800000> : vector<16xf32>
    %35 = vector.multi_reduction <maximumf>, %34, %cst_18 [1] : vector<16x16xf32> to vector<16xf32>
    %36 = vector.shape_cast %35 : vector<16xf32> to vector<16x1xf32>
    %37 = vector.broadcast %36 : vector<16x1xf32> to vector<16x16xf32>
    %38 = arith.subf %34, %37 : vector<16x16xf32>
    %39 = math.exp %38 : vector<16x16xf32>
    %cst_19 = arith.constant dense<0.000000e+00> : vector<16xf32>
    %40 = vector.multi_reduction <add>, %39, %cst_19 [1] : vector<16x16xf32> to vector<16xf32>
    %41 = vector.shape_cast %40 : vector<16xf32> to vector<16x1xf32>
    %42 = tpu.reciprocal %41 {approx = true} : vector<16x1xf32> -> vector<16x1xf32>
    %43 = vector.broadcast %42 : vector<16x1xf32> to vector<16x16xf32>
    %44 = arith.mulf %39, %43 : vector<16x16xf32>
    %cst_20 = arith.constant dense<0.000000e+00> : vector<16x8xf32>
    %45 = tpu.matmul %44, %31, %cst_20 {dimension_numbers = #tpu.dot_dimension_numbers<[1], [0], [0], [1], [0, 0, 1, 1], [], []>} : vector<16x16xf32>, vector<16x8xf32>, vector<16x8xf32> -> vector<16x8xf32>
    %46 = vector.extract_strided_slice %9 {offsets = [0, 16], sizes = [16, 8], strides = [1, 1]} : vector<16x32xf32> to vector<16x8xf32>
    %47 = vector.extract_strided_slice %10 {offsets = [0, 16], sizes = [16, 8], strides = [1, 1]} : vector<16x32xf32> to vector<16x8xf32>
    %48 = vector.extract_strided_slice %11 {offsets = [0, 16], sizes = [16, 8], strides = [1, 1]} : vector<16x32xf32> to vector<16x8xf32>
    %cst_21 = arith.constant dense<0.000000e+00> : vector<16x16xf32>
    %49 = tpu.matmul %46, %47, %cst_21 {dimension_numbers = #tpu.dot_dimension_numbers<[1], [1], [0], [0], [0, 0, 1, 0], [], []>} : vector<16x8xf32>, vector<16x8xf32>, vector<16x16xf32> -> vector<16x16xf32>
    %cst_22 = arith.constant 0.353553385 : f32
    %50 = vector.broadcast %cst_22 : f32 to vector<16x16xf32>
    %51 = arith.mulf %49, %50 : vector<16x16xf32>
    %cst_23 = arith.constant dense<0xFF800000> : vector<16xf32>
    %52 = vector.multi_reduction <maximumf>, %51, %cst_23 [1] : vector<16x16xf32> to vector<16xf32>
    %53 = vector.shape_cast %52 : vector<16xf32> to vector<16x1xf32>
    %54 = vector.broadcast %53 : vector<16x1xf32> to vector<16x16xf32>
    %55 = arith.subf %51, %54 : vector<16x16xf32>
    %56 = math.exp %55 : vector<16x16xf32>
    %cst_24 = arith.constant dense<0.000000e+00> : vector<16xf32>
    %57 = vector.multi_reduction <add>, %56, %cst_24 [1] : vector<16x16xf32> to vector<16xf32>
    %58 = vector.shape_cast %57 : vector<16xf32> to vector<16x1xf32>
    %59 = tpu.reciprocal %58 {approx = true} : vector<16x1xf32> -> vector<16x1xf32>
    %60 = vector.broadcast %59 : vector<16x1xf32> to vector<16x16xf32>
    %61 = arith.mulf %56, %60 : vector<16x16xf32>
    %cst_25 = arith.constant dense<0.000000e+00> : vector<16x8xf32>
    %62 = tpu.matmul %61, %48, %cst_25 {dimension_numbers = #tpu.dot_dimension_numbers<[1], [0], [0], [1], [0, 0, 1, 1], [], []>} : vector<16x16xf32>, vector<16x8xf32>, vector<16x8xf32> -> vector<16x8xf32>
    %63 = vector.extract_strided_slice %9 {offsets = [0, 24], sizes = [16, 8], strides = [1, 1]} : vector<16x32xf32> to vector<16x8xf32>
    %64 = vector.extract_strided_slice %10 {offsets = [0, 24], sizes = [16, 8], strides = [1, 1]} : vector<16x32xf32> to vector<16x8xf32>
    %65 = vector.extract_strided_slice %11 {offsets = [0, 24], sizes = [16, 8], strides = [1, 1]} : vector<16x32xf32> to vector<16x8xf32>
    %cst_26 = arith.constant dense<0.000000e+00> : vector<16x16xf32>
    %66 = tpu.matmul %63, %64, %cst_26 {dimension_numbers = #tpu.dot_dimension_numbers<[1], [1], [0], [0], [0, 0, 1, 0], [], []>} : vector<16x8xf32>, vector<16x8xf32>, vector<16x16xf32> -> vector<16x16xf32>
    %cst_27 = arith.constant 0.353553385 : f32
    %67 = vector.broadcast %cst_27 : f32 to vector<16x16xf32>
    %68 = arith.mulf %66, %67 : vector<16x16xf32>
    %cst_28 = arith.constant dense<0xFF800000> : vector<16xf32>
    %69 = vector.multi_reduction <maximumf>, %68, %cst_28 [1] : vector<16x16xf32> to vector<16xf32>
    %70 = vector.shape_cast %69 : vector<16xf32> to vector<16x1xf32>
    %71 = vector.broadcast %70 : vector<16x1xf32> to vector<16x16xf32>
    %72 = arith.subf %68, %71 : vector<16x16xf32>
    %73 = math.exp %72 : vector<16x16xf32>
    %cst_29 = arith.constant dense<0.000000e+00> : vector<16xf32>
    %74 = vector.multi_reduction <add>, %73, %cst_29 [1] : vector<16x16xf32> to vector<16xf32>
    %75 = vector.shape_cast %74 : vector<16xf32> to vector<16x1xf32>
    %76 = tpu.reciprocal %75 {approx = true} : vector<16x1xf32> -> vector<16x1xf32>
    %77 = vector.broadcast %76 : vector<16x1xf32> to vector<16x16xf32>
    %78 = arith.mulf %73, %77 : vector<16x16xf32>
    %cst_30 = arith.constant dense<0.000000e+00> : vector<16x8xf32>
    %79 = tpu.matmul %78, %65, %cst_30 {dimension_numbers = #tpu.dot_dimension_numbers<[1], [0], [0], [1], [0, 0, 1, 1], [], []>} : vector<16x16xf32>, vector<16x8xf32>, vector<16x8xf32> -> vector<16x8xf32>
    %80 = tpu.concatenate %28, %45, %62, %79 in 1 : vector<16x8xf32>, vector<16x8xf32>, vector<16x8xf32>, vector<16x8xf32> -> vector<16x32xf32>
    %c0_31 = arith.constant 0 : index
    %c0_32 = arith.constant 0 : index
    %81 = vector.load %arg11[%c0_31, %c0_32] : memref<32x32xf32, #tpu.memory_space<vmem>>, vector<32x32xf32>
    %cst_33 = arith.constant dense<0.000000e+00> : vector<16x32xf32>
    %82 = tpu.matmul %80, %81, %cst_33 {dimension_numbers = #tpu.dot_dimension_numbers<[1], [0], [0], [1], [0, 0, 1, 1], [], []>} : vector<16x32xf32>, vector<32x32xf32>, vector<16x32xf32> -> vector<16x32xf32>
    %c0_34 = arith.constant 0 : index
    %c0_35 = arith.constant 0 : index
    %83 = vector.load %arg12[%c0_34, %c0_35] : memref<1x32xf32, #tpu.memory_space<vmem>>, vector<1x32xf32>
    %84 = vector.broadcast %83 : vector<1x32xf32> to vector<16x32xf32>
    %85 = arith.addf %82, %84 : vector<16x32xf32>
    %c0_36 = arith.constant 0 : index
    %c0_37 = arith.constant 0 : index
    %c0_38 = arith.constant 0 : index
    %86 = vector.load %arg13[%c0_36, %c0_37, %c0_38] : memref<1x16x32xf32, #tpu.memory_space<vmem>>, vector<1x16x32xf32>
    %87 = vector.shape_cast %86 : vector<1x16x32xf32> to vector<16x32xf32>
    %88 = vector.shape_cast %85 : vector<16x32xf32> to vector<1x16x32xf32>
    tpu.vector_store %arg13[%c0_36, %c0_37, %c0_38], %88 {strides = array<i32>} : memref<1x16x32xf32, #tpu.memory_space<vmem>>, vector<1x16x32xf32>,
    return
  }
  func.func @transform_0(%arg0: i32, %arg1: i32) -> (i32, i32, i32) {
    %c0_i32 = arith.constant 0 : i32
    %c0_i32_0 = arith.constant 0 : i32
    return %arg0, %arg1, %c0_i32 : i32, i32, i32
  }
  func.func @transform_1(%arg0: i32, %arg1: i32) -> (i32, i32, i32) {
    %c0_i32 = arith.constant 0 : i32
    %c0_i32_0 = arith.constant 0 : i32
    %c0_i32_1 = arith.constant 0 : i32
    return %arg0, %c0_i32, %c0_i32_0 : i32, i32, i32
  }
  func.func @transform_2(%arg0: i32, %arg1: i32) -> (i32, i32, i32) {
    %c0_i32 = arith.constant 0 : i32
    %c0_i32_0 = arith.constant 0 : i32
    %c0_i32_1 = arith.constant 0 : i32
    return %arg0, %c0_i32, %c0_i32_0 : i32, i32, i32
  }
  func.func @transform_3(%arg0: i32, %arg1: i32) -> (i32, i32) {
    %c0_i32 = arith.constant 0 : i32
    %c0_i32_0 = arith.constant 0 : i32
    %c0_i32_1 = arith.constant 0 : i32
    return %c0_i32, %c0_i32_0 : i32, i32
  }
  func.func @transform_4(%arg0: i32, %arg1: i32) -> (i32, i32) {
    %c0_i32 = arith.constant 0 : i32
    %c0_i32_0 = arith.constant 0 : i32
    %c0_i32_1 = arith.constant 0 : i32
    return %c0_i32, %c0_i32_0 : i32, i32
  }
  func.func @transform_5(%arg0: i32, %arg1: i32) -> (i32, i32) {
    %c0_i32 = arith.constant 0 : i32
    %c0_i32_0 = arith.constant 0 : i32
    %c0_i32_1 = arith.constant 0 : i32
    return %c0_i32, %c0_i32_0 : i32, i32
  }
  func.func @transform_6(%arg0: i32, %arg1: i32) -> (i32, i32) {
    %c0_i32 = arith.constant 0 : i32
    %c0_i32_0 = arith.constant 0 : i32
    %c0_i32_1 = arith.constant 0 : i32
    return %c0_i32, %c0_i32_0 : i32, i32
  }
  func.func @transform_7(%arg0: i32, %arg1: i32) -> (i32, i32) {
    %c0_i32 = arith.constant 0 : i32
    %c0_i32_0 = arith.constant 0 : i32
    %c0_i32_1 = arith.constant 0 : i32
    return %c0_i32, %c0_i32_0 : i32, i32
  }
  func.func @transform_8(%arg0: i32, %arg1: i32) -> (i32, i32) {
    %c0_i32 = arith.constant 0 : i32
    %c0_i32_0 = arith.constant 0 : i32
    %c0_i32_1 = arith.constant 0 : i32
    return %c0_i32, %c0_i32_0 : i32, i32
  }
  func.func @transform_9(%arg0: i32, %arg1: i32) -> (i32, i32) {
    %c0_i32 = arith.constant 0 : i32
    %c0_i32_0 = arith.constant 0 : i32
    %c0_i32_1 = arith.constant 0 : i32
    return %c0_i32, %c0_i32_0 : i32, i32
  }
  func.func @transform_10(%arg0: i32, %arg1: i32) -> (i32, i32) {
    %c0_i32 = arith.constant 0 : i32
    %c0_i32_0 = arith.constant 0 : i32
    %c0_i32_1 = arith.constant 0 : i32
    return %c0_i32, %c0_i32_0 : i32, i32
  }
  func.func @transform_11(%arg0: i32, %arg1: i32) -> (i32, i32, i32) {
    %c0_i32 = arith.constant 0 : i32
    %c0_i32_0 = arith.constant 0 : i32
    return %arg0, %arg1, %c0_i32 : i32, i32, i32
  }
}

</mosaic_0001>

<llo_original>
// kernel: tpu_custom_call.1
$region0: #{tpu_custom_call.1}
  #allocation0 [shape = 'u32[]', space=smem, size = 0x4, offset = 0x4, fixed_abs, tag = 'smem constant byte address 0x4 - core index']
  #allocation1 [shape = 'u32[72,128]{1,0:T(1,128)}', space=vmem, size = 0x9000, scoped, tag = 'internal scratch']
  #allocation2 [shape = 'f32[16,32]{1,0:T(8,128)}', space=vmem, size = 0x2000, scoped, tag = 'scratch operand']
  #allocation3 [shape = 'f32[16,32]{1,0:T(8,128)}', space=vmem, size = 0x2000, scoped, tag = 'scratch operand']
  %s0 = inlined_call_operand.hbm [shape: f32[2,16,32], index: 0, kind: input, shape index: {}]
  %s1 = inlined_call_operand.hbm [shape: f32[2,16,32], index: 1, kind: input, shape index: {}]
  %s2 = inlined_call_operand.hbm [shape: f32[2,16,32], index: 2, kind: input, shape index: {}]
  %s3 = inlined_call_operand.hbm [shape: f32[32,32], index: 3, kind: input, shape index: {}]
  %s4 = inlined_call_operand.vmem [shape: f32[1,32], index: 4, kind: input, shape index: {}]
  %s5 = inlined_call_operand.hbm [shape: f32[32,32], index: 5, kind: input, shape index: {}]
  %s6 = inlined_call_operand.vmem [shape: f32[1,32], index: 6, kind: input, shape index: {}]
  %s7 = inlined_call_operand.hbm [shape: f32[32,32], index: 7, kind: input, shape index: {}]
  %s8 = inlined_call_operand.vmem [shape: f32[1,32], index: 8, kind: input, shape index: {}]
  %s9 = inlined_call_operand.hbm [shape: f32[32,32], index: 9, kind: input, shape index: {}]
  %s10 = inlined_call_operand.vmem [shape: f32[1,32], index: 10, kind: input, shape index: {}]
  %s11 = inlined_call_operand.hbm [shape: f32[2,16,32], index: 11, kind: output, shape index: {}]
  %s12 = sld [smem:[#allocation0]]
  $region109: #{tpu_custom_call.1} parent=0
    _
  %s14 = ssub.s32 1, %s12
  %s15 = scalar_select 0, %s14, %s12
  $region1: #{tpu_custom_call.1} parent=0
    #allocation4 [shape = 'u8[16384]{0}', space=vmem, size = 0x4000, scoped, tag = 'input window, operand 0']
    #allocation5 [shape = 's32[2]{0}', space=sflag, size = 0x8, scoped, tag = 'scoped memory for tpu_custom_call.1']
    #allocation6 [shape = 's32[2]{0}', space=sflag, size = 0x8, scoped, tag = 'scoped memory for tpu_custom_call.1']
    #allocation7 [shape = 'u8[16384]{0}', space=vmem, size = 0x4000, scoped, tag = 'input window, operand 1']
    #allocation8 [shape = 's32[2]{0}', space=sflag, size = 0x8, scoped, tag = 'scoped memory for tpu_custom_call.1']
    #allocation9 [shape = 'u8[16384]{0}', space=vmem, size = 0x4000, scoped, tag = 'input window, operand 2']
    #allocation10 [shape = 'u8[16384]{0}', space=vmem, size = 0x4000, scoped, tag = 'input window, operand 3, single buffered']
    #allocation11 [shape = 's32[1]{0}', space=sflag, size = 0x4, scoped, tag = 'scoped memory for tpu_custom_call.1']
    #allocation12 [shape = 'u8[16384]{0}', space=vmem, size = 0x4000, scoped, tag = 'input window, operand 5, single buffered']
    #allocation13 [shape = 'u8[16384]{0}', space=vmem, size = 0x4000, scoped, tag = 'input window, operand 7, single buffered']
    #allocation14 [shape = 's32[1]{0}', space=sflag, size = 0x4, scoped, tag = 'scoped memory for tpu_custom_call.1']
    #allocation15 [shape = 'u8[16384]{0}', space=vmem, size = 0x4000, scoped, tag = 'input window, operand 9, single buffered']
    #allocation16 [shape = 'u8[16384]{0}', space=vmem, size = 0x4000, scoped, tag = 'output window, operand 0']
    %16 = vsyncpa [#allocation5], 0
    %s17 = scalar_lea.sflag [#allocation5], 1
    %18 = vsyncpa %s17, 0
    %19 = vsyncpa [#allocation8], 0
    %s20 = scalar_lea.sflag [#allocation8], 1
    %21 = vsyncpa %s20, 0
    %22 = vsyncpa [#allocation11], 0
    %23 = vsyncpa [#allocation14], 0
    %24 = vsyncpa [#allocation6], 0
    %s25 = scalar_lea.sflag [#allocation6], 1
    %26 = vsyncpa %s25, 0
    loop: start=0, step=1, limit=4
    $region2: #{tpu_custom_call.1} parent=1 // loop_pre_header
      _
    $region3: #{tpu_custom_call.1} parent=1 // loop_header
      %s28 = sphi 0, %s32
      %p29 = scmp.ge.s32.totalorder %s28, 4
      %s35 = sphi 0, %s47
      %s36 = sphi 0, %s43
      %s37 = sphi 0, %s35
      %s38 = sphi 0, %s36
      %s39 = sphi 0, %s37
      %s40 = sphi 0, %s38
      %s52 = sphi 0, %s54
      %s55 = sphi 0, %s52
      %s56 = sphi 0, %s55
      %s72 = sphi 0, %s56
      %s78 = sphi 0, %s80
      %s81 = sphi 0, %s78
      %s82 = sphi 0, %s81
      %s98 = sphi 0, %s82
      %s104 = sphi 0, %s106
      %s107 = sphi 0, %s104
      %s108 = sphi 0, %s107
      %s124 = sphi 0, %s108
      %s128 = sphi 0, %s128
      %s130 = sphi 0, %s128
      %s131 = sphi 0, %s130
      %s145 = sphi 0, %s131
      %s149 = sphi 0, %s149
      %s151 = sphi 0, %s149
      %s152 = sphi 0, %s151
      %s166 = sphi 0, %s152
      %s170 = sphi 0, %s170
      %s172 = sphi 0, %s170
      %s173 = sphi 0, %s172
      %s187 = sphi 0, %s173
      %s191 = sphi 0, %s191
      %s193 = sphi 0, %s191
      %s194 = sphi 0, %s193
      %s208 = sphi 0, %s194
      %s212 = sphi 0, %s212
      %s214 = sphi 0, %s212
      %s215 = sphi 0, %s214
      %s229 = sphi 0, %s215
      %s233 = sphi 0, %s233
      %s235 = sphi 0, %s233
      %s236 = sphi 0, %s235
      %s250 = sphi 0, %s236
      %s254 = sphi 0, %s254
      %s256 = sphi 0, %s254
      %s257 = sphi 0, %s256
      %s271 = sphi 0, %s257
      %s275 = sphi 0, %s275
      %s277 = sphi 0, %s275
      %s278 = sphi 0, %s277
      %s292 = sphi 0, %s278
      %s300 = sphi 0, %s302
      %s303 = sphi 0, %s300
      %s304 = sphi 0, %s303
      %s320 = sphi 0, %s304
    $region4: #{tpu_custom_call.1} parent=1 // loop_header_branch
      %31 = sbr.rel (%p29) target = $region8
    $region5: #{tpu_custom_call.1} parent=1 // loop_body
      %s33 = ssub.s32 %s28, 1
      %s34 = ssub.s32 %s28, 2
      %s41 = sadd.s32 1, %s36
      %p42 = scmp.ge.s32.totalorder %s41, 1
      %s43 = scalar_select %p42, 0, %s41
      %s44 = sadd.s32 1, %s35
      %s45 = scalar_select %p42, %s44, %s35
      %p46 = scmp.ge.s32.totalorder %s45, 2
      %s47 = scalar_select %p46, 0, %s45
      %s48 = ssub.s32 %s35, %s47
      %s49 = ssub.s32 %s36, %s43
      %s50 = sor.u32 %s48, %s49
      %p51 = scmp.eq.s32.totalorder %s50, 0
      %s53 = sadd.s32 %s52, 1
      %s54 = scalar_select %p51, %s52, %s53
      %p57 = pneg %p51
      %p58 = scmp.eq.s32.totalorder %s28, 1
      %p59 = por %p57, %p58
      %p60 = scmp.ne.s32.totalorder %s52, %s55
      %p61 = scmp.eq.s32.totalorder %s28, 0
      %p62 = por %p60, %p61
      %p63 = scmp.ne.s32.totalorder %s52, %s55
      %p64 = scmp.eq.s32.totalorder %s33, 1
      %p65 = por %p63, %p64
      %p66 = scmp.ne.s32.totalorder %s55, %s56
      %p67 = scmp.eq.s32.totalorder %s33, 0
      %p68 = por %p66, %p67
      %p69 = scmp.ne.s32.totalorder %s55, %s56
      %p70 = scmp.eq.s32.totalorder %s34, 1
      %p71 = por %p69, %p70
      %p73 = scmp.ne.s32.totalorder %s56, %s72
      %p74 = scmp.eq.s32.totalorder %s34, 0
      %p75 = por %p73, %p74
      %s76 = ssub.s32 %s35, %s47
      %p77 = scmp.eq.s32.totalorder %s76, 0
      %s79 = sadd.s32 %s78, 1
      %s80 = scalar_select %p77, %s78, %s79
      %p83 = pneg %p77
      %p84 = scmp.eq.s32.totalorder %s28, 1
      %p85 = por %p83, %p84
      %p86 = scmp.ne.s32.totalorder %s78, %s81
      %p87 = scmp.eq.s32.totalorder %s28, 0
      %p88 = por %p86, %p87
      %p89 = scmp.ne.s32.totalorder %s78, %s81
      %p90 = scmp.eq.s32.totalorder %s33, 1
      %p91 = por %p89, %p90
      %p92 = scmp.ne.s32.totalorder %s81, %s82
      %p93 = scmp.eq.s32.totalorder %s33, 0
      %p94 = por %p92, %p93
      %p95 = scmp.ne.s32.totalorder %s81, %s82
      %p96 = scmp.eq.s32.totalorder %s34, 1
      %p97 = por %p95, %p96
      %p99 = scmp.ne.s32.totalorder %s82, %s98
      %p100 = scmp.eq.s32.totalorder %s34, 0
      %p101 = por %p99, %p100
      %s102 = ssub.s32 %s35, %s47
      %p103 = scmp.eq.s32.totalorder %s102, 0
      %s105 = sadd.s32 %s104, 1
      %s106 = scalar_select %p103, %s104, %s105
      %p109 = pneg %p103
      %p110 = scmp.eq.s32.totalorder %s28, 1
      %p111 = por %p109, %p110
      %p112 = scmp.ne.s32.totalorder %s104, %s107
      %p113 = scmp.eq.s32.totalorder %s28, 0
      %p114 = por %p112, %p113
      %p115 = scmp.ne.s32.totalorder %s104, %s107
      %p116 = scmp.eq.s32.totalorder %s33, 1
      %p117 = por %p115, %p116
      %p118 = scmp.ne.s32.totalorder %s107, %s108
      %p119 = scmp.eq.s32.totalorder %s33, 0
      %p120 = por %p118, %p119
      %p121 = scmp.ne.s32.totalorder %s107, %s108
      %p122 = scmp.eq.s32.totalorder %s34, 1
      %p123 = por %p121, %p122
      %p125 = scmp.ne.s32.totalorder %s108, %s124
      %p126 = scmp.eq.s32.totalorder %s34, 0
      %p127 = por %p125, %p126
      %s129 = sadd.s32 %s128, 1
      %p132 = scmp.eq.s32.totalorder %s28, 1
      %p133 = scmp.ne.s32.totalorder %s128, %s130
      %p134 = scmp.eq.s32.totalorder %s28, 0
      %p135 = por %p133, %p134
      %p136 = scmp.ne.s32.totalorder %s128, %s130
      %p137 = scmp.eq.s32.totalorder %s33, 1
      %p138 = por %p136, %p137
      %p139 = scmp.ne.s32.totalorder %s130, %s131
      %p140 = scmp.eq.s32.totalorder %s33, 0
      %p141 = por %p139, %p140
      %p142 = scmp.ne.s32.totalorder %s130, %s131
      %p143 = scmp.eq.s32.totalorder %s34, 1
      %p144 = por %p142, %p143
      %p146 = scmp.ne.s32.totalorder %s131, %s145
      %p147 = scmp.eq.s32.totalorder %s34, 0
      %p148 = por %p146, %p147
      %s150 = sadd.s32 %s149, 1
      %p153 = scmp.eq.s32.totalorder %s28, 1
      %p154 = scmp.ne.s32.totalorder %s149, %s151
      %p155 = scmp.eq.s32.totalorder %s28, 0
      %p156 = por %p154, %p155
      %p157 = scmp.ne.s32.totalorder %s149, %s151
      %p158 = scmp.eq.s32.totalorder %s33, 1
      %p159 = por %p157, %p158
      %p160 = scmp.ne.s32.totalorder %s151, %s152
      %p161 = scmp.eq.s32.totalorder %s33, 0
      %p162 = por %p160, %p161
      %p163 = scmp.ne.s32.totalorder %s151, %s152
      %p164 = scmp.eq.s32.totalorder %s34, 1
      %p165 = por %p163, %p164
      %p167 = scmp.ne.s32.totalorder %s152, %s166
      %p168 = scmp.eq.s32.totalorder %s34, 0
      %p169 = por %p167, %p168
      %s171 = sadd.s32 %s170, 1
      %p174 = scmp.eq.s32.totalorder %s28, 1
      %p175 = scmp.ne.s32.totalorder %s170, %s172
      %p176 = scmp.eq.s32.totalorder %s28, 0
      %p177 = por %p175, %p176
      %p178 = scmp.ne.s32.totalorder %s170, %s172
      %p179 = scmp.eq.s32.totalorder %s33, 1
      %p180 = por %p178, %p179
      %p181 = scmp.ne.s32.totalorder %s172, %s173
      %p182 = scmp.eq.s32.totalorder %s33, 0
      %p183 = por %p181, %p182
      %p184 = scmp.ne.s32.totalorder %s172, %s173
      %p185 = scmp.eq.s32.totalorder %s34, 1
      %p186 = por %p184, %p185
      %p188 = scmp.ne.s32.totalorder %s173, %s187
      %p189 = scmp.eq.s32.totalorder %s34, 0
      %p190 = por %p188, %p189
      %s192 = sadd.s32 %s191, 1
      %p195 = scmp.eq.s32.totalorder %s28, 1
      %p196 = scmp.ne.s32.totalorder %s191, %s193
      %p197 = scmp.eq.s32.totalorder %s28, 0
      %p198 = por %p196, %p197
      %p199 = scmp.ne.s32.totalorder %s191, %s193
      %p200 = scmp.eq.s32.totalorder %s33, 1
      %p201 = por %p199, %p200
      %p202 = scmp.ne.s32.totalorder %s193, %s194
      %p203 = scmp.eq.s32.totalorder %s33, 0
      %p204 = por %p202, %p203
      %p205 = scmp.ne.s32.totalorder %s193, %s194
      %p206 = scmp.eq.s32.totalorder %s34, 1
      %p207 = por %p205, %p206
      %p209 = scmp.ne.s32.totalorder %s194, %s208
      %p210 = scmp.eq.s32.totalorder %s34, 0
      %p211 = por %p209, %p210
      %s213 = sadd.s32 %s212, 1
      %p216 = scmp.eq.s32.totalorder %s28, 1
      %p217 = scmp.ne.s32.totalorder %s212, %s214
      %p218 = scmp.eq.s32.totalorder %s28, 0
      %p219 = por %p217, %p218
      %p220 = scmp.ne.s32.totalorder %s212, %s214
      %p221 = scmp.eq.s32.totalorder %s33, 1
      %p222 = por %p220, %p221
      %p223 = scmp.ne.s32.totalorder %s214, %s215
      %p224 = scmp.eq.s32.totalorder %s33, 0
      %p225 = por %p223, %p224
      %p226 = scmp.ne.s32.totalorder %s214, %s215
      %p227 = scmp.eq.s32.totalorder %s34, 1
      %p228 = por %p226, %p227
      %p230 = scmp.ne.s32.totalorder %s215, %s229
      %p231 = scmp.eq.s32.totalorder %s34, 0
      %p232 = por %p230, %p231
      %s234 = sadd.s32 %s233, 1
      %p237 = scmp.eq.s32.totalorder %s28, 1
      %p238 = scmp.ne.s32.totalorder %s233, %s235
      %p239 = scmp.eq.s32.totalorder %s28, 0
      %p240 = por %p238, %p239
      %p241 = scmp.ne.s32.totalorder %s233, %s235
      %p242 = scmp.eq.s32.totalorder %s33, 1
      %p243 = por %p241, %p242
      %p244 = scmp.ne.s32.totalorder %s235, %s236
      %p245 = scmp.eq.s32.totalorder %s33, 0
      %p246 = por %p244, %p245
      %p247 = scmp.ne.s32.totalorder %s235, %s236
      %p248 = scmp.eq.s32.totalorder %s34, 1
      %p249 = por %p247, %p248
      %p251 = scmp.ne.s32.totalorder %s236, %s250
      %p252 = scmp.eq.s32.totalorder %s34, 0
      %p253 = por %p251, %p252
      %s255 = sadd.s32 %s254, 1
      %p258 = scmp.eq.s32.totalorder %s28, 1
      %p259 = scmp.ne.s32.totalorder %s254, %s256
      %p260 = scmp.eq.s32.totalorder %s28, 0
      %p261 = por %p259, %p260
      %p262 = scmp.ne.s32.totalorder %s254, %s256
      %p263 = scmp.eq.s32.totalorder %s33, 1
      %p264 = por %p262, %p263
      %p265 = scmp.ne.s32.totalorder %s256, %s257
      %p266 = scmp.eq.s32.totalorder %s33, 0
      %p267 = por %p265, %p266
      %p268 = scmp.ne.s32.totalorder %s256, %s257
      %p269 = scmp.eq.s32.totalorder %s34, 1
      %p270 = por %p268, %p269
      %p272 = scmp.ne.s32.totalorder %s257, %s271
      %p273 = scmp.eq.s32.totalorder %s34, 0
      %p274 = por %p272, %p273
      %s276 = sadd.s32 %s275, 1
      %p279 = scmp.eq.s32.totalorder %s28, 1
      %p280 = scmp.ne.s32.totalorder %s275, %s277
      %p281 = scmp.eq.s32.totalorder %s28, 0
      %p282 = por %p280, %p281
      %p283 = scmp.ne.s32.totalorder %s275, %s277
      %p284 = scmp.eq.s32.totalorder %s33, 1
      %p285 = por %p283, %p284
      %p286 = scmp.ne.s32.totalorder %s277, %s278
      %p287 = scmp.eq.s32.totalorder %s33, 0
      %p288 = por %p286, %p287
      %p289 = scmp.ne.s32.totalorder %s277, %s278
      %p290 = scmp.eq.s32.totalorder %s34, 1
      %p291 = por %p289, %p290
      %p293 = scmp.ne.s32.totalorder %s278, %s292
      %p294 = scmp.eq.s32.totalorder %s34, 0
      %p295 = por %p293, %p294
      %s296 = ssub.s32 %s35, %s47
      %s297 = ssub.s32 %s36, %s43
      %s298 = sor.u32 %s296, %s297
      %p299 = scmp.eq.s32.totalorder %s298, 0
      %s301 = sadd.s32 %s300, 1
      %s302 = scalar_select %p299, %s300, %s301
      %p305 = pneg %p299
      %p306 = scmp.eq.s32.totalorder %s28, 1
      %p307 = por %p305, %p306
      %p308 = scmp.ne.s32.totalorder %s300, %s303
      %p309 = scmp.eq.s32.totalorder %s28, 0
      %p310 = por %p308, %p309
      %p311 = scmp.ne.s32.totalorder %s300, %s303
      %p312 = scmp.eq.s32.totalorder %s33, 1
      %p313 = por %p311, %p312
      %p314 = scmp.ne.s32.totalorder %s303, %s304
      %p315 = scmp.eq.s32.totalorder %s33, 0
      %p316 = por %p314, %p315
      %p317 = scmp.ne.s32.totalorder %s303, %s304
      %p318 = scmp.eq.s32.totalorder %s34, 1
      %p319 = por %p317, %p318
      %p321 = scmp.ne.s32.totalorder %s304, %s320
      %p322 = scmp.eq.s32.totalorder %s34, 0
      %p323 = por %p321, %p322
      %p324 = scmp.le.s32.totalorder 1, %s28
      %p325 = scmp.lt.s32.totalorder %s28, 3
      %p326 = pnand %p324, %p325
      %p327 = pneg %p326
      // Predicated region
      $region9: #{tpu_custom_call.1} parent=5 // pred_check
        _
      $region10: #{tpu_custom_call.1} parent=5 // pred_check_branch
        %329 = sbr.rel (%p326) target = $region12
      $region11: #{tpu_custom_call.1} parent=5 // pred_region
        %s330 = ssub.s32 %s28, 1
        // Predicated region
        $region13: #{tpu_custom_call.1} parent=11 // pred_check
          %p331 = pneg %p141
        $region14: #{tpu_custom_call.1} parent=11 // pred_check_branch
          %333 = sbr.rel (%p331) target = $region16
        $region15: #{tpu_custom_call.1} parent=11 // pred_region
          %335 = vsyncadd [#allocation11], 0
          %s336 = sshll.u32 %s3, 4
          %s337 = int_to_ptr.hbm [resolvable:$true] %s336
          %s338 = sshll.u32 [#allocation10], 4
          %s339 = int_to_ptr.vmem [resolvable:$true] %s338
          %344 = dma.hbm_to_vmem [thread:$0]  %s337, 512, %s339, [#allocation11], 128, 128, 8
        $region16: #{tpu_custom_call.1} parent=11 // pred_fallthru
          _
        // Predicated region
        $region17: #{tpu_custom_call.1} parent=11 // pred_check
          %p345 = pneg %p162
        $region18: #{tpu_custom_call.1} parent=11 // pred_check_branch
          %347 = sbr.rel (%p345) target = $region20
        $region19: #{tpu_custom_call.1} parent=11 // pred_region
          _
        $region20: #{tpu_custom_call.1} parent=11 // pred_fallthru
          _
        // Predicated region
        $region21: #{tpu_custom_call.1} parent=11 // pred_check
          %p348 = pneg %p183
        $region22: #{tpu_custom_call.1} parent=11 // pred_check_branch
          %350 = sbr.rel (%p348) target = $region24
        $region23: #{tpu_custom_call.1} parent=11 // pred_region
          %352 = vsyncadd [#allocation11], 0
          %s353 = sshll.u32 %s5, 4
          %s354 = int_to_ptr.hbm [resolvable:$true] %s353
          %s355 = sshll.u32 [#allocation12], 4
          %s356 = int_to_ptr.vmem [resolvable:$true] %s355
          %361 = dma.hbm_to_vmem [thread:$0]  %s354, 512, %s356, [#allocation11], 128, 128, 8
        $region24: #{tpu_custom_call.1} parent=11 // pred_fallthru
          _
        // Predicated region
        $region25: #{tpu_custom_call.1} parent=11 // pred_check
          %p362 = pneg %p204
        $region26: #{tpu_custom_call.1} parent=11 // pred_check_branch
          %364 = sbr.rel (%p362) target = $region28
        $region27: #{tpu_custom_call.1} parent=11 // pred_region
          _
        $region28: #{tpu_custom_call.1} parent=11 // pred_fallthru
          _
        // Predicated region
        $region29: #{tpu_custom_call.1} parent=11 // pred_check
          %p365 = pneg %p225
        $region30: #{tpu_custom_call.1} parent=11 // pred_check_branch
          %367 = sbr.rel (%p365) target = $region32
        $region31: #{tpu_custom_call.1} parent=11 // pred_region
          %369 = vsyncadd [#allocation14], 0
          %s370 = sshll.u32 %s7, 4
          %s371 = int_to_ptr.hbm [resolvable:$true] %s370
          %s372 = sshll.u32 [#allocation13], 4
          %s373 = int_to_ptr.vmem [resolvable:$true] %s372
          %378 = dma.hbm_to_vmem [thread:$0]  %s371, 512, %s373, [#allocation14], 128, 128, 8
        $region32: #{tpu_custom_call.1} parent=11 // pred_fallthru
          _
        // Predicated region
        $region33: #{tpu_custom_call.1} parent=11 // pred_check
          %p379 = pneg %p246
        $region34: #{tpu_custom_call.1} parent=11 // pred_check_branch
          %381 = sbr.rel (%p379) target = $region36
        $region35: #{tpu_custom_call.1} parent=11 // pred_region
          _
        $region36: #{tpu_custom_call.1} parent=11 // pred_fallthru
          _
        // Predicated region
        $region37: #{tpu_custom_call.1} parent=11 // pred_check
          %p382 = pneg %p267
        $region38: #{tpu_custom_call.1} parent=11 // pred_check_branch
          %384 = sbr.rel (%p382) target = $region40
        $region39: #{tpu_custom_call.1} parent=11 // pred_region
          %386 = vsyncadd [#allocation14], 0
          %s387 = sshll.u32 %s9, 4
          %s388 = int_to_ptr.hbm [resolvable:$true] %s387
          %s389 = sshll.u32 [#allocation15], 4
          %s390 = int_to_ptr.vmem [resolvable:$true] %s389
          %395 = dma.hbm_to_vmem [thread:$0]  %s388, 512, %s390, [#allocation14], 128, 128, 8
        $region40: #{tpu_custom_call.1} parent=11 // pred_fallthru
          _
        // Predicated region
        $region41: #{tpu_custom_call.1} parent=11 // pred_check
          %p396 = pneg %p288
        $region42: #{tpu_custom_call.1} parent=11 // pred_check_branch
          %398 = sbr.rel (%p396) target = $region44
        $region43: #{tpu_custom_call.1} parent=11 // pred_region
          _
        $region44: #{tpu_custom_call.1} parent=11 // pred_fallthru
          _
      $region12: #{tpu_custom_call.1} parent=5 // pred_fallthru
        _
      %p399 = scmp.lt.s32.totalorder %s28, 2
      // Predicated region
      $region45: #{tpu_custom_call.1} parent=5 // pred_check
        %p400 = pneg %p399
      $region46: #{tpu_custom_call.1} parent=5 // pred_check_branch
        %402 = sbr.rel (%p400) target = $region48
      $region47: #{tpu_custom_call.1} parent=5 // pred_region
        // Predicated region
        $region49: #{tpu_custom_call.1} parent=47 // pred_check
          %p403 = pneg %p62
        $region50: #{tpu_custom_call.1} parent=47 // pred_check_branch
          %405 = sbr.rel (%p403) target = $region52
        $region51: #{tpu_custom_call.1} parent=47 // pred_region
          %s406 = sand.u32 %s52, 1
          %s407 = scalar_lea.sflag [#allocation5], %s406
          %s408 = sand.u32 %s52, 1
          %s409 = smul.addr %s408, 16
          %s410 = scalar_lea.vmem [#allocation4], %s409
          %s411 = smul.u32 2, %s36
          %413 = vsyncadd %s407, 0
          %s414 = smul.addr %s35, 2
          %s415 = sadd.s32 %s411, %s414
          %s416 = smul.addr %s415, 8
          %s417 = scalar_lea.hbm %s0, %s416
          %s418 = sshll.u32 %s417, 4
          %s419 = int_to_ptr.hbm [resolvable:$true] %s418
          %s420 = sshll.u32 %s410, 4
          %s421 = int_to_ptr.vmem [resolvable:$true] %s420
          %426 = dma.hbm_to_vmem [thread:$0]  %s419, 256, %s421, %s407, 128, 128, 8
        $region52: #{tpu_custom_call.1} parent=47 // pred_fallthru
          _
        // Predicated region
        $region53: #{tpu_custom_call.1} parent=47 // pred_check
          %p427 = pneg %p88
        $region54: #{tpu_custom_call.1} parent=47 // pred_check_branch
          %429 = sbr.rel (%p427) target = $region56
        $region55: #{tpu_custom_call.1} parent=47 // pred_region
          %s430 = sand.u32 %s28, 1
          %s431 = scalar_lea.sflag [#allocation8], %s430
          %s432 = sand.u32 %s78, 1
          %s433 = smul.addr %s432, 16
          %s434 = scalar_lea.vmem [#allocation7], %s433
          %436 = vsyncadd %s431, 0
          %s437 = smul.addr %s35, 2
          %s438 = smul.addr %s437, 8
          %s439 = scalar_lea.hbm %s1, %s438
          %s440 = sshll.u32 %s439, 4
          %s441 = int_to_ptr.hbm [resolvable:$true] %s440
          %s442 = sshll.u32 %s434, 4
          %s443 = int_to_ptr.vmem [resolvable:$true] %s442
          %448 = dma.hbm_to_vmem [thread:$0]  %s441, 256, %s443, %s431, 128, 128, 8
        $region56: #{tpu_custom_call.1} parent=47 // pred_fallthru
          _
        // Predicated region
        $region57: #{tpu_custom_call.1} parent=47 // pred_check
          %p449 = pneg %p114
        $region58: #{tpu_custom_call.1} parent=47 // pred_check_branch
          %451 = sbr.rel (%p449) target = $region60
        $region59: #{tpu_custom_call.1} parent=47 // pred_region
          %s452 = sand.u32 %s28, 1
          %s453 = scalar_lea.sflag [#allocation8], %s452
          %s454 = sand.u32 %s104, 1
          %s455 = smul.addr %s454, 16
          %s456 = scalar_lea.vmem [#allocation9], %s455
          %458 = vsyncadd %s453, 0
          %s459 = smul.addr %s35, 2
          %s460 = smul.addr %s459, 8
          %s461 = scalar_lea.hbm %s2, %s460
          %s462 = sshll.u32 %s461, 4
          %s463 = int_to_ptr.hbm [resolvable:$true] %s462
          %s464 = sshll.u32 %s456, 4
          %s465 = int_to_ptr.vmem [resolvable:$true] %s464
          %470 = dma.hbm_to_vmem [thread:$0]  %s463, 256, %s465, %s453, 128, 128, 8
        $region60: #{tpu_custom_call.1} parent=47 // pred_fallthru
          _
      $region48: #{tpu_custom_call.1} parent=5 // pred_fallthru
        _
      %p471 = scmp.le.s32.totalorder 1, %s28
      %p472 = scmp.lt.s32.totalorder %s28, 3
      %p473 = pnand %p471, %p472
      %p474 = pneg %p473
      // Predicated region
      $region61: #{tpu_custom_call.1} parent=5 // pred_check
        _
      $region62: #{tpu_custom_call.1} parent=5 // pred_check_branch
        %476 = sbr.rel (%p473) target = $region64
      $region63: #{tpu_custom_call.1} parent=5 // pred_region
        %s477 = ssub.s32 %s28, 1
        %s478 = sand.u32 %s55, 1
        %s479 = scalar_lea.sflag [#allocation5], %s478
        %s480 = sand.u32 %s55, 1
        %s481 = smul.addr %s480, 16
        %s482 = scalar_lea.vmem [#allocation4], %s481
        // Predicated region
        $region65: #{tpu_custom_call.1} parent=63 // pred_check
          %p483 = pneg %p68
        $region66: #{tpu_custom_call.1} parent=63 // pred_check_branch
          %485 = sbr.rel (%p483) target = $region68
        $region67: #{tpu_custom_call.1} parent=63 // pred_region
          %487 = dma.done %s479, 256
        $region68: #{tpu_custom_call.1} parent=63 // pred_fallthru
          _
        %s488 = sand.u32 %s33, 1
        %s489 = scalar_lea.sflag [#allocation8], %s488
        %s490 = sand.u32 %s81, 1
        %s491 = smul.addr %s490, 16
        %s492 = scalar_lea.vmem [#allocation7], %s491
        // Predicated region
        $region69: #{tpu_custom_call.1} parent=63 // pred_check
          %p493 = pneg %p94
        $region70: #{tpu_custom_call.1} parent=63 // pred_check_branch
          %495 = sbr.rel (%p493) target = $region72
        $region71: #{tpu_custom_call.1} parent=63 // pred_region
          %497 = dma.done %s489, 256
        $region72: #{tpu_custom_call.1} parent=63 // pred_fallthru
          _
        %s498 = sand.u32 %s33, 1
        %s499 = scalar_lea.sflag [#allocation8], %s498
        %s500 = sand.u32 %s107, 1
        %s501 = smul.addr %s500, 16
        %s502 = scalar_lea.vmem [#allocation9], %s501
        // Predicated region
        $region73: #{tpu_custom_call.1} parent=63 // pred_check
          %p503 = pneg %p120
        $region74: #{tpu_custom_call.1} parent=63 // pred_check_branch
          %505 = sbr.rel (%p503) target = $region76
        $region75: #{tpu_custom_call.1} parent=63 // pred_region
          %507 = dma.done %s499, 256
        $region76: #{tpu_custom_call.1} parent=63 // pred_fallthru
          _
        // Predicated region
        $region77: #{tpu_custom_call.1} parent=63 // pred_check
          %p508 = pneg %p141
        $region78: #{tpu_custom_call.1} parent=63 // pred_check_branch
          %510 = sbr.rel (%p508) target = $region80
        $region79: #{tpu_custom_call.1} parent=63 // pred_region
          %512 = dma.done [#allocation11], 512
        $region80: #{tpu_custom_call.1} parent=63 // pred_fallthru
          _
        // Predicated region
        $region81: #{tpu_custom_call.1} parent=63 // pred_check
          %p513 = pneg %p183
        $region82: #{tpu_custom_call.1} parent=63 // pred_check_branch
          %515 = sbr.rel (%p513) target = $region84
        $region83: #{tpu_custom_call.1} parent=63 // pred_region
          %517 = dma.done [#allocation11], 512
        $region84: #{tpu_custom_call.1} parent=63 // pred_fallthru
          _
        // Predicated region
        $region85: #{tpu_custom_call.1} parent=63 // pred_check
          %p518 = pneg %p225
        $region86: #{tpu_custom_call.1} parent=63 // pred_check_branch
          %520 = sbr.rel (%p518) target = $region88
        $region87: #{tpu_custom_call.1} parent=63 // pred_region
          %522 = dma.done [#allocation14], 512
        $region88: #{tpu_custom_call.1} parent=63 // pred_fallthru
          _
        // Predicated region
        $region89: #{tpu_custom_call.1} parent=63 // pred_check
          %p523 = pneg %p267
        $region90: #{tpu_custom_call.1} parent=63 // pred_check_branch
          %525 = sbr.rel (%p523) target = $region92
        $region91: #{tpu_custom_call.1} parent=63 // pred_region
          %527 = dma.done [#allocation14], 512
        $region92: #{tpu_custom_call.1} parent=63 // pred_fallthru
          _
        %s528 = sand.u32 %s55, 1
        %s529 = scalar_lea.sflag [#allocation5], %s528
        %s530 = sand.u32 %s55, 1
        %s531 = smul.addr %s530, 16
        %s532 = scalar_lea.vmem [#allocation4], %s531
        %p533 = pneg %p68
        %p534 = pneg %p65
        %s535 = sand.u32 %s33, 1
        %s536 = scalar_lea.sflag [#allocation8], %s535
        %s537 = sand.u32 %s81, 1
        %s538 = smul.addr %s537, 16
        %s539 = scalar_lea.vmem [#allocation7], %s538
        %p540 = pneg %p94
        %p541 = pneg %p91
        %s542 = sand.u32 %s33, 1
        %s543 = scalar_lea.sflag [#allocation8], %s542
        %s544 = sand.u32 %s107, 1
        %s545 = smul.addr %s544, 16
        %s546 = scalar_lea.vmem [#allocation9], %s545
        %p547 = pneg %p120
        %p548 = pneg %p117
        %p549 = pneg %p141
        %p550 = pneg %p138
        %p551 = pneg %p162
        %p552 = pneg %p159
        %p553 = pneg %p183
        %p554 = pneg %p180
        %p555 = pneg %p204
        %p556 = pneg %p201
        %p557 = pneg %p225
        %p558 = pneg %p222
        %p559 = pneg %p246
        %p560 = pneg %p243
        %p561 = pneg %p267
        %p562 = pneg %p264
        %p563 = pneg %p288
        %p564 = pneg %p285
        %p565 = pneg %p316
        %p566 = pneg %p313
        %s567 = sand.u32 %s303, 1
        %s568 = scalar_lea.sflag [#allocation6], %s567
        %s569 = sand.u32 %s303, 1
        %s570 = smul.addr %s569, 16
        %s571 = scalar_lea.vmem [#allocation16], %s570
        %s572 = smul.u32 2, %s38
        %s573 = smul.u32 2, %s38
        %p574 = scmp.eq.s32.totalorder %s38, 0
        // Predicated region
        $region93: #{tpu_custom_call.1} parent=63 // pred_check
          %p575 = pneg %p574
        $region94: #{tpu_custom_call.1} parent=63 // pred_check_branch
          %577 = sbr.rel (%p575) target = $region96
        $region95: #{tpu_custom_call.1} parent=63 // pred_region
          %v578 = vld [vmem:[%s492] sm:$0xff]
          %v579 = vld [vmem:[%s492 + $0x8] sm:$0xff]
          %v580 = vld [vmem:[%s502] sm:$0xff]
          %v581 = vld [vmem:[%s502 + $0x8] sm:$0xff]
          %v582 = vld [vmem:[#allocation12] sm:$0xff]
          %v583 = vld [vmem:[#allocation12 + $0x8] sm:$0xff]
          %v584 = vld [vmem:[#allocation12 + $0x10] sm:$0xff]
          %v585 = vld [vmem:[#allocation12 + $0x18] sm:$0xff]
          %v586 = vld [vmem:[%s6] sm:$0x1]
          %v588 = vperm.slane %v586, 0
          %vm590 = vcmask 261120
          %v592 = vsel %vm590, %v578, 0
          %v595 = vsel %vm590, %v579, 0
          %597 = vmatpush.msra.mxu0 0.0
          %598 = vmatpush.msra.mxu0 0.0
          %599 = vmatpush.msra.mxu0 0.0
          %600 = vmatpush.msra.mxu0 0.0
          %601 = vmatpush.msra.mxu0 0.0
          %602 = vmatpush.msra.mxu0 0.0
          %603 = vmatpush.msra.mxu0 0.0
          %604 = vmatpush.msra.mxu0 0.0
          %605 = vmatpush.msra.mxu0 0.0
          %606 = vmatpush.msra.mxu0 0.0
          %607 = vmatpush.msra.mxu0 0.0
          %608 = vmatpush.msra.mxu0 0.0
          %609 = vmatpush.msra.mxu0 %v585
          %610 = vmatpush.msra.mxu0 %v584
          %611 = vmatpush.msra.mxu0 %v583
          %612 = vmatpush.msra.mxu0 %v582
          %613 = vmatmul.f32.gmra.mxu0 %v592
          %v614 = vpop.f32.mrf.mxu0
          %v615 = vadd.f32 %v588, %v614
          %616 = vmatmul.f32.gmra.mxu0 %v595
          %v617 = vpop.f32.mrf.mxu0
          %v618 = vadd.f32 %v588, %v617
          %619 = vdwg.mxu0
          %620 = vst.msk [vmem:[#allocation2] sm:$0xff] %vm590, %v615
          %621 = vst.msk [vmem:[#allocation2 + $0x8] sm:$0xff] %vm590, %v618
          %v622 = vld [vmem:[#allocation13] sm:$0xff]
          %v623 = vld [vmem:[#allocation13 + $0x8] sm:$0xff]
          %v624 = vld [vmem:[#allocation13 + $0x10] sm:$0xff]
          %v625 = vld [vmem:[#allocation13 + $0x18] sm:$0xff]
          %v626 = vld [vmem:[%s8] sm:$0x1]
          %v628 = vperm.slane %v626, 0
          %v631 = vsel %vm590, %v580, 0
          %v634 = vsel %vm590, %v581, 0
          %636 = vmatpush.msra.mxu0 0.0
          %637 = vmatpush.msra.mxu0 0.0
          %638 = vmatpush.msra.mxu0 0.0
          %639 = vmatpush.msra.mxu0 0.0
          %640 = vmatpush.msra.mxu0 0.0
          %641 = vmatpush.msra.mxu0 0.0
          %642 = vmatpush.msra.mxu0 0.0
          %643 = vmatpush.msra.mxu0 0.0
          %644 = vmatpush.msra.mxu0 0.0
          %645 = vmatpush.msra.mxu0 0.0
          %646 = vmatpush.msra.mxu0 0.0
          %647 = vmatpush.msra.mxu0 0.0
          %648 = vmatpush.msra.mxu0 %v625
          %649 = vmatpush.msra.mxu0 %v624
          %650 = vmatpush.msra.mxu0 %v623
          %651 = vmatpush.msra.mxu0 %v622
          %652 = vmatmul.f32.gmra.mxu0 %v631
          %v653 = vpop.f32.mrf.mxu0
          %v654 = vadd.f32 %v628, %v653
          %655 = vmatmul.f32.gmra.mxu0 %v634
          %v656 = vpop.f32.mrf.mxu0
          %v657 = vadd.f32 %v628, %v656
          %658 = vdwg.mxu0
          %659 = vst.msk [vmem:[#allocation3] sm:$0xff] %vm590, %v654
          %660 = vst.msk [vmem:[#allocation3 + $0x8] sm:$0xff] %vm590, %v657
        $region96: #{tpu_custom_call.1} parent=63 // pred_fallthru
          _
        %v661 = vld [vmem:[%s482] sm:$0xff]
        %v662 = vld [vmem:[%s482 + $0x8] sm:$0xff]
        %v663 = vld [vmem:[#allocation10] sm:$0xff]
        %v664 = vld [vmem:[#allocation10 + $0x8] sm:$0xff]
        %v665 = vld [vmem:[#allocation10 + $0x10] sm:$0xff]
        %v666 = vld [vmem:[#allocation10 + $0x18] sm:$0xff]
        %v667 = vld [vmem:[%s4] sm:$0x1]
        %v669 = vperm.slane %v667, 0
        %vm671 = vcmask 261120
        %v673 = vsel %vm671, %v661, 0
        %v676 = vsel %vm671, %v662, 0
        %678 = vmatpush.msra.mxu0 0.0
        %679 = vmatpush.msra.mxu0 0.0
        %680 = vmatpush.msra.mxu0 0.0
        %681 = vmatpush.msra.mxu0 0.0
        %682 = vmatpush.msra.mxu0 0.0
        %683 = vmatpush.msra.mxu0 0.0
        %684 = vmatpush.msra.mxu0 0.0
        %685 = vmatpush.msra.mxu0 0.0
        %686 = vmatpush.msra.mxu0 0.0
        %687 = vmatpush.msra.mxu0 0.0
        %688 = vmatpush.msra.mxu0 0.0
        %689 = vmatpush.msra.mxu0 0.0
        %690 = vmatpush.msra.mxu0 %v666
        %691 = vmatpush.msra.mxu0 %v665
        %692 = vmatpush.msra.mxu0 %v664
        %693 = vmatpush.msra.mxu0 %v663
        %694 = vmatmul.f32.gmra.mxu0 %v673
        %v695 = vpop.f32.mrf.mxu0
        %v696 = vadd.f32 %v669, %v695
        %697 = vmatmul.f32.gmra.mxu0 %v676
        %v698 = vpop.f32.mrf.mxu0
        %v699 = vadd.f32 %v669, %v698
        %700 = vdwg.mxu0
        %v701 = vld [vmem:[#allocation2] sm:$0xff]
        %v702 = vld [vmem:[#allocation2 + $0x8] sm:$0xff]
        %v703 = vld [vmem:[#allocation3] sm:$0xff]
        %v704 = vld [vmem:[#allocation3 + $0x8] sm:$0xff]
        %vm705 = vcmask 64512
        %v707 = vsel %vm705, %v696, 0
        %v710 = vsel %vm705, %v699, 0
        %v713 = vsel %vm705, %v701, 0
        %v716 = vsel %vm705, %v702, 0
        %718 = vmatpush.xpose.msra.mxu0 0.0
        %719 = vmatpush.xpose.msra.mxu0 0.0
        %720 = vmatpush.xpose.msra.mxu0 0.0
        %721 = vmatpush.xpose.msra.mxu0 0.0
        %722 = vmatpush.xpose.msra.mxu0 0.0
        %723 = vmatpush.xpose.msra.mxu0 0.0
        %724 = vmatpush.xpose.msra.mxu0 0.0
        %725 = vmatpush.xpose.msra.mxu0 0.0
        %726 = vmatpush.xpose.msra.mxu0 0.0
        %727 = vmatpush.xpose.msra.mxu0 0.0
        %728 = vmatpush.xpose.msra.mxu0 0.0
        %729 = vmatpush.xpose.msra.mxu0 0.0
        %730 = vmatpush.xpose.msra.mxu0 0.0
        %731 = vmatpush.xpose.msra.mxu0 0.0
        %732 = vmatpush.xpose.msra.mxu0 %v716
        %733 = vmatpush.xpose.msra.mxu0 %v713
        %734 = vmatmul.f32.gmra.mxu0 %v707
        %v735 = vpop.f32.mrf.mxu0
        %v736 = vadd.f32 0.0, %v735
        %737 = vmatmul.f32.gmra.mxu0 %v710
        %v738 = vpop.f32.mrf.mxu0
        %v739 = vadd.f32 0.0, %v738
        %740 = vdwg.mxu0
        %v741 = vmul.f32 %v736, 0.35355338
        %v742 = vmul.f32 %v739, 0.35355338
        %vm743 = vcmask 130048
        %v744 = vsel %vm743, %v741, -inf
        %745 = vmax.xlane.f32.xlu0 %v744
        %v746 = vpop.xlane.xlu0 %745
        %v747 = vsel %vm743, %v742, -inf
        %748 = vmax.xlane.f32.xlu0 %v747
        %v749 = vpop.xlane.xlu0 %748
        %v750 = vsub.f32 %v741, %v746
        %v751 = vsub.f32 %v742, %v749
        %v752 = vmul.f32 %v750, 1.442695
        %v753 = vpow.pop %v752
        %v754 = vmul.f32 %v751, 1.442695
        %v755 = vpow.pop %v754
        %v756 = vsel %vm743, %v753, 0.0
        %757 = vadd.xlane.f32.xlu0 %v756
        %v758 = vpop.xlane.xlu0 %757
        %v759 = vsel %vm743, %v755, 0.0
        %760 = vadd.xlane.f32.xlu0 %v759
        %v761 = vpop.xlane.xlu0 %760
        %v762 = vrcp.pop %v758
        %v763 = vrcp.pop %v761
        %v764 = vmul.f32 %v753, %v762
        %v765 = vmul.f32 %v755, %v763
        %v767 = vsel %vm743, %v764, 0
        %v770 = vsel %vm743, %v765, 0
        %772 = vmatpush.msra.mxu0 0.0
        %773 = vmatpush.msra.mxu0 0.0
        %774 = vmatpush.msra.mxu0 0.0
        %775 = vmatpush.msra.mxu0 0.0
        %776 = vmatpush.msra.mxu0 0.0
        %777 = vmatpush.msra.mxu0 0.0
        %778 = vmatpush.msra.mxu0 0.0
        %779 = vmatpush.msra.mxu0 0.0
        %780 = vmatpush.msra.mxu0 0.0
        %781 = vmatpush.msra.mxu0 0.0
        %782 = vmatpush.msra.mxu0 0.0
        %783 = vmatpush.msra.mxu0 0.0
        %784 = vmatpush.msra.mxu0 0.0
        %785 = vmatpush.msra.mxu0 0.0
        %786 = vmatpush.msra.mxu0 %v704
        %787 = vmatpush.msra.mxu0 %v703
        %788 = vmatmul.f32.gmra.mxu0 %v767
        %v789 = vpop.f32.mrf.mxu0
        %v790 = vadd.f32 0.0, %v789
        %791 = vmatmul.f32.gmra.mxu0 %v770
        %v792 = vpop.f32.mrf.mxu0
        %v793 = vadd.f32 0.0, %v792
        %794 = vdwg.mxu0
        %795 = vrot.lane.b32.xlu0 %v696, 120
        %v796 = vpop.permute.xlu0 %795
        %797 = vrot.lane.b32.xlu0 %v699, 120
        %v798 = vpop.permute.xlu0 %797
        %799 = vrot.lane.b32.xlu0 %v701, 120
        %v800 = vpop.permute.xlu0 %799
        %801 = vrot.lane.b32.xlu0 %v702, 120
        %v802 = vpop.permute.xlu0 %801
        %v803 = vsel %vm705, %v796, 0
        %v805 = vsel %vm705, %v798, 0
        %v807 = vsel %vm705, %v800, 0
        %v809 = vsel %vm705, %v802, 0
        %811 = vmatpush.xpose.msra.mxu0 0.0
        %812 = vmatpush.xpose.msra.mxu0 0.0
        %813 = vmatpush.xpose.msra.mxu0 0.0
        %814 = vmatpush.xpose.msra.mxu0 0.0
        %815 = vmatpush.xpose.msra.mxu0 0.0
        %816 = vmatpush.xpose.msra.mxu0 0.0
        %817 = vmatpush.xpose.msra.mxu0 0.0
        %818 = vmatpush.xpose.msra.mxu0 0.0
        %819 = vmatpush.xpose.msra.mxu0 0.0
        %820 = vmatpush.xpose.msra.mxu0 0.0
        %821 = vmatpush.xpose.msra.mxu0 0.0
        %822 = vmatpush.xpose.msra.mxu0 0.0
        %823 = vmatpush.xpose.msra.mxu0 0.0
        %824 = vmatpush.xpose.msra.mxu0 0.0
        %825 = vmatpush.xpose.msra.mxu0 %v809
        %826 = vmatpush.xpose.msra.mxu0 %v807
        %827 = vmatmul.f32.gmra.mxu0 %v803
        %v828 = vpop.f32.mrf.mxu0
        %v829 = vadd.f32 0.0, %v828
        %830 = vmatmul.f32.gmra.mxu0 %v805
        %v831 = vpop.f32.mrf.mxu0
        %v832 = vadd.f32 0.0, %v831
        %833 = vdwg.mxu0
        %v834 = vmul.f32 %v829, 0.35355338
        %v835 = vmul.f32 %v832, 0.35355338
        %v836 = vsel %vm743, %v834, -inf
        %837 = vmax.xlane.f32.xlu0 %v836
        %v838 = vpop.xlane.xlu0 %837
        %v839 = vsel %vm743, %v835, -inf
        %840 = vmax.xlane.f32.xlu0 %v839
        %v841 = vpop.xlane.xlu0 %840
        %v842 = vsub.f32 %v834, %v838
        %v843 = vsub.f32 %v835, %v841
        %v844 = vmul.f32 %v842, 1.442695
        %v845 = vpow.pop %v844
        %v846 = vmul.f32 %v843, 1.442695
        %v847 = vpow.pop %v846
        %v848 = vsel %vm743, %v845, 0.0
        %849 = vadd.xlane.f32.xlu0 %v848
        %v850 = vpop.xlane.xlu0 %849
        %v851 = vsel %vm743, %v847, 0.0
        %852 = vadd.xlane.f32.xlu0 %v851
        %v853 = vpop.xlane.xlu0 %852
        %v854 = vrcp.pop %v850
        %v855 = vrcp.pop %v853
        %v856 = vmul.f32 %v845, %v854
        %v857 = vmul.f32 %v847, %v855
        %860 = vrot.lane.b32.xlu0 %v703, 120
        %v861 = vpop.permute.xlu0 %860
        %862 = vrot.lane.b32.xlu0 %v704, 120
        %v863 = vpop.permute.xlu0 %862
        %v867 = vsel %vm743, %v856, 0
        %v870 = vsel %vm743, %v857, 0
        %872 = vmatpush.msra.mxu0 0.0
        %873 = vmatpush.msra.mxu0 0.0
        %874 = vmatpush.msra.mxu0 0.0
        %875 = vmatpush.msra.mxu0 0.0
        %876 = vmatpush.msra.mxu0 0.0
        %877 = vmatpush.msra.mxu0 0.0
        %878 = vmatpush.msra.mxu0 0.0
        %879 = vmatpush.msra.mxu0 0.0
        %880 = vmatpush.msra.mxu0 0.0
        %881 = vmatpush.msra.mxu0 0.0
        %882 = vmatpush.msra.mxu0 0.0
        %883 = vmatpush.msra.mxu0 0.0
        %884 = vmatpush.msra.mxu0 0.0
        %885 = vmatpush.msra.mxu0 0.0
        %886 = vmatpush.msra.mxu0 %v863
        %887 = vmatpush.msra.mxu0 %v861
        %888 = vmatmul.f32.gmra.mxu0 %v867
        %v889 = vpop.f32.mrf.mxu0
        %v890 = vadd.f32 0.0, %v889
        %891 = vmatmul.f32.gmra.mxu0 %v870
        %v892 = vpop.f32.mrf.mxu0
        %v893 = vadd.f32 0.0, %v892
        %894 = vdwg.mxu0
        %895 = vrot.lane.b32.xlu0 %v696, 112
        %v896 = vpop.permute.xlu0 %895
        %897 = vrot.lane.b32.xlu0 %v699, 112
        %v898 = vpop.permute.xlu0 %897
        %899 = vrot.lane.b32.xlu0 %v701, 112
        %v900 = vpop.permute.xlu0 %899
        %901 = vrot.lane.b32.xlu0 %v702, 112
        %v902 = vpop.permute.xlu0 %901
        %v903 = vsel %vm705, %v896, 0
        %v905 = vsel %vm705, %v898, 0
        %v907 = vsel %vm705, %v900, 0
        %v909 = vsel %vm705, %v902, 0
        %911 = vmatpush.xpose.msra.mxu0 0.0
        %912 = vmatpush.xpose.msra.mxu0 0.0
        %913 = vmatpush.xpose.msra.mxu0 0.0
        %914 = vmatpush.xpose.msra.mxu0 0.0
        %915 = vmatpush.xpose.msra.mxu0 0.0
        %916 = vmatpush.xpose.msra.mxu0 0.0
        %917 = vmatpush.xpose.msra.mxu0 0.0
        %918 = vmatpush.xpose.msra.mxu0 0.0
        %919 = vmatpush.xpose.msra.mxu0 0.0
        %920 = vmatpush.xpose.msra.mxu0 0.0
        %921 = vmatpush.xpose.msra.mxu0 0.0
        %922 = vmatpush.xpose.msra.mxu0 0.0
        %923 = vmatpush.xpose.msra.mxu0 0.0
        %924 = vmatpush.xpose.msra.mxu0 0.0
        %925 = vmatpush.xpose.msra.mxu0 %v909
        %926 = vmatpush.xpose.msra.mxu0 %v907
        %927 = vmatmul.f32.gmra.mxu0 %v903
        %v928 = vpop.f32.mrf.mxu0
        %v929 = vadd.f32 0.0, %v928
        %930 = vmatmul.f32.gmra.mxu0 %v905
        %v931 = vpop.f32.mrf.mxu0
        %v932 = vadd.f32 0.0, %v931
        %933 = vdwg.mxu0
        %v934 = vmul.f32 %v929, 0.35355338
        %v935 = vmul.f32 %v932, 0.35355338
        %v936 = vsel %vm743, %v934, -inf
        %937 = vmax.xlane.f32.xlu0 %v936
        %v938 = vpop.xlane.xlu0 %937
        %v939 = vsel %vm743, %v935, -inf
        %940 = vmax.xlane.f32.xlu0 %v939
        %v941 = vpop.xlane.xlu0 %940
        %v942 = vsub.f32 %v934, %v938
        %v943 = vsub.f32 %v935, %v941
        %v944 = vmul.f32 %v942, 1.442695
        %v945 = vpow.pop %v944
        %v946 = vmul.f32 %v943, 1.442695
        %v947 = vpow.pop %v946
        %v948 = vsel %vm743, %v945, 0.0
        %949 = vadd.xlane.f32.xlu0 %v948
        %v950 = vpop.xlane.xlu0 %949
        %v951 = vsel %vm743, %v947, 0.0
        %952 = vadd.xlane.f32.xlu0 %v951
        %v953 = vpop.xlane.xlu0 %952
        %v954 = vrcp.pop %v950
        %v955 = vrcp.pop %v953
        %v956 = vmul.f32 %v945, %v954
        %v957 = vmul.f32 %v947, %v955
        %958 = vrot.lane.b32.xlu0 %v703, 112
        %v959 = vpop.permute.xlu0 %958
        %960 = vrot.lane.b32.xlu0 %v704, 112
        %v961 = vpop.permute.xlu0 %960
        %v965 = vsel %vm743, %v956, 0
        %v968 = vsel %vm743, %v957, 0
        %970 = vmatpush.msra.mxu0 0.0
        %971 = vmatpush.msra.mxu0 0.0
        %972 = vmatpush.msra.mxu0 0.0
        %973 = vmatpush.msra.mxu0 0.0
        %974 = vmatpush.msra.mxu0 0.0
        %975 = vmatpush.msra.mxu0 0.0
        %976 = vmatpush.msra.mxu0 0.0
        %977 = vmatpush.msra.mxu0 0.0
        %978 = vmatpush.msra.mxu0 0.0
        %979 = vmatpush.msra.mxu0 0.0
        %980 = vmatpush.msra.mxu0 0.0
        %981 = vmatpush.msra.mxu0 0.0
        %982 = vmatpush.msra.mxu0 0.0
        %983 = vmatpush.msra.mxu0 0.0
        %984 = vmatpush.msra.mxu0 %v961
        %985 = vmatpush.msra.mxu0 %v959
        %986 = vmatmul.f32.gmra.mxu0 %v965
        %v987 = vpop.f32.mrf.mxu0
        %v988 = vadd.f32 0.0, %v987
        %989 = vmatmul.f32.gmra.mxu0 %v968
        %v990 = vpop.f32.mrf.mxu0
        %v991 = vadd.f32 0.0, %v990
        %992 = vdwg.mxu0
        %993 = vrot.lane.b32.xlu0 %v696, 104
        %v994 = vpop.permute.xlu0 %993
        %995 = vrot.lane.b32.xlu0 %v699, 104
        %v996 = vpop.permute.xlu0 %995
        %997 = vrot.lane.b32.xlu0 %v701, 104
        %v998 = vpop.permute.xlu0 %997
        %999 = vrot.lane.b32.xlu0 %v702, 104
        %v1000 = vpop.permute.xlu0 %999
        %v1001 = vsel %vm705, %v994, 0
        %v1003 = vsel %vm705, %v996, 0
        %v1005 = vsel %vm705, %v998, 0
        %v1007 = vsel %vm705, %v1000, 0
        %1009 = vmatpush.xpose.msra.mxu0 0.0
        %1010 = vmatpush.xpose.msra.mxu0 0.0
        %1011 = vmatpush.xpose.msra.mxu0 0.0
        %1012 = vmatpush.xpose.msra.mxu0 0.0
        %1013 = vmatpush.xpose.msra.mxu0 0.0
        %1014 = vmatpush.xpose.msra.mxu0 0.0
        %1015 = vmatpush.xpose.msra.mxu0 0.0
        %1016 = vmatpush.xpose.msra.mxu0 0.0
        %1017 = vmatpush.xpose.msra.mxu0 0.0
        %1018 = vmatpush.xpose.msra.mxu0 0.0
        %1019 = vmatpush.xpose.msra.mxu0 0.0
        %1020 = vmatpush.xpose.msra.mxu0 0.0
        %1021 = vmatpush.xpose.msra.mxu0 0.0
        %1022 = vmatpush.xpose.msra.mxu0 0.0
        %1023 = vmatpush.xpose.msra.mxu0 %v1007
        %1024 = vmatpush.xpose.msra.mxu0 %v1005
        %1025 = vmatmul.f32.gmra.mxu0 %v1001
        %v1026 = vpop.f32.mrf.mxu0
        %v1027 = vadd.f32 0.0, %v1026
        %1028 = vmatmul.f32.gmra.mxu0 %v1003
        %v1029 = vpop.f32.mrf.mxu0
        %v1030 = vadd.f32 0.0, %v1029
        %1031 = vdwg.mxu0
        %v1032 = vmul.f32 %v1027, 0.35355338
        %v1033 = vmul.f32 %v1030, 0.35355338
        %v1034 = vsel %vm743, %v1032, -inf
        %1035 = vmax.xlane.f32.xlu0 %v1034
        %v1036 = vpop.xlane.xlu0 %1035
        %v1037 = vsel %vm743, %v1033, -inf
        %1038 = vmax.xlane.f32.xlu0 %v1037
        %v1039 = vpop.xlane.xlu0 %1038
        %v1040 = vsub.f32 %v1032, %v1036
        %v1041 = vsub.f32 %v1033, %v1039
        %v1042 = vmul.f32 %v1040, 1.442695
        %v1043 = vpow.pop %v1042
        %v1044 = vmul.f32 %v1041, 1.442695
        %v1045 = vpow.pop %v1044
        %v1046 = vsel %vm743, %v1043, 0.0
        %1047 = vadd.xlane.f32.xlu0 %v1046
        %v1048 = vpop.xlane.xlu0 %1047
        %v1049 = vsel %vm743, %v1045, 0.0
        %1050 = vadd.xlane.f32.xlu0 %v1049
        %v1051 = vpop.xlane.xlu0 %1050
        %v1052 = vrcp.pop %v1048
        %v1053 = vrcp.pop %v1051
        %v1054 = vmul.f32 %v1043, %v1052
        %v1055 = vmul.f32 %v1045, %v1053
        %1056 = vrot.lane.b32.xlu0 %v703, 104
        %v1057 = vpop.permute.xlu0 %1056
        %1058 = vrot.lane.b32.xlu0 %v704, 104
        %v1059 = vpop.permute.xlu0 %1058
        %v1063 = vsel %vm743, %v1054, 0
        %v1066 = vsel %vm743, %v1055, 0
        %1068 = vmatpush.msra.mxu0 0.0
        %1069 = vmatpush.msra.mxu0 0.0
        %1070 = vmatpush.msra.mxu0 0.0
        %1071 = vmatpush.msra.mxu0 0.0
        %1072 = vmatpush.msra.mxu0 0.0
        %1073 = vmatpush.msra.mxu0 0.0
        %1074 = vmatpush.msra.mxu0 0.0
        %1075 = vmatpush.msra.mxu0 0.0
        %1076 = vmatpush.msra.mxu0 0.0
        %1077 = vmatpush.msra.mxu0 0.0
        %1078 = vmatpush.msra.mxu0 0.0
        %1079 = vmatpush.msra.mxu0 0.0
        %1080 = vmatpush.msra.mxu0 0.0
        %1081 = vmatpush.msra.mxu0 0.0
        %1082 = vmatpush.msra.mxu0 %v1059
        %1083 = vmatpush.msra.mxu0 %v1057
        %1084 = vmatmul.f32.gmra.mxu0 %v1063
        %v1085 = vpop.f32.mrf.mxu0
        %v1086 = vadd.f32 0.0, %v1085
        %1087 = vmatmul.f32.gmra.mxu0 %v1066
        %v1088 = vpop.f32.mrf.mxu0
        %v1089 = vadd.f32 0.0, %v1088
        %1090 = vdwg.mxu0
        %1093 = vrot.lane.b32.xlu0 %v890, 8
        %v1094 = vpop.permute.xlu0 %1093
        %1095 = vrot.lane.b32.xlu0 %v893, 8
        %v1096 = vpop.permute.xlu0 %1095
        %1101 = vrot.lane.b32.xlu0 %v988, 16
        %v1102 = vpop.permute.xlu0 %1101
        %1103 = vrot.lane.b32.xlu0 %v991, 16
        %v1104 = vpop.permute.xlu0 %1103
        %1109 = vrot.lane.b32.xlu0 %v1086, 24
        %v1110 = vpop.permute.xlu0 %1109
        %1111 = vrot.lane.b32.xlu0 %v1089, 24
        %v1112 = vpop.permute.xlu0 %1111
        %v1115 = vsel %vm705, %v790, %v1094
        %v1116 = vsel %vm705, %v793, %v1096
        %v1117 = vsel %vm743, %v1115, %v1102
        %v1118 = vsel %vm743, %v1116, %v1104
        %vm1119 = vcmask 195584
        %v1120 = vsel %vm1119, %v1117, %v1110
        %v1121 = vsel %vm1119, %v1118, %v1112
        %v1122 = vld [vmem:[#allocation15] sm:$0xff]
        %v1123 = vld [vmem:[#allocation15 + $0x8] sm:$0xff]
        %v1124 = vld [vmem:[#allocation15 + $0x10] sm:$0xff]
        %v1125 = vld [vmem:[#allocation15 + $0x18] sm:$0xff]
        %v1126 = vld [vmem:[%s10] sm:$0x1]
        %v1128 = vperm.slane %v1126, 0
        %v1131 = vsel %vm671, %v1120, 0
        %v1134 = vsel %vm671, %v1121, 0
        %1136 = vmatpush.msra.mxu0 0.0
        %1137 = vmatpush.msra.mxu0 0.0
        %1138 = vmatpush.msra.mxu0 0.0
        %1139 = vmatpush.msra.mxu0 0.0
        %1140 = vmatpush.msra.mxu0 0.0
        %1141 = vmatpush.msra.mxu0 0.0
        %1142 = vmatpush.msra.mxu0 0.0
        %1143 = vmatpush.msra.mxu0 0.0
        %1144 = vmatpush.msra.mxu0 0.0
        %1145 = vmatpush.msra.mxu0 0.0
        %1146 = vmatpush.msra.mxu0 0.0
        %1147 = vmatpush.msra.mxu0 0.0
        %1148 = vmatpush.msra.mxu0 %v1125
        %1149 = vmatpush.msra.mxu0 %v1124
        %1150 = vmatpush.msra.mxu0 %v1123
        %1151 = vmatpush.msra.mxu0 %v1122
        %1152 = vmatmul.f32.gmra.mxu0 %v1131
        %v1153 = vpop.f32.mrf.mxu0
        %v1154 = vadd.f32 %v1128, %v1153
        %1155 = vmatmul.f32.gmra.mxu0 %v1134
        %v1156 = vpop.f32.mrf.mxu0
        %v1157 = vadd.f32 %v1128, %v1156
        %1158 = vdwg.mxu0
        %1159 = vst.msk [vmem:[%s571] sm:$0xff] %vm671, %v1154
        %1160 = vst.msk [vmem:[%s571 + $0x8] sm:$0xff] %vm671, %v1157
        %s1161 = sand.u32 %s303, 1
        %s1162 = scalar_lea.sflag [#allocation6], %s1161
        %s1163 = sand.u32 %s303, 1
        %s1164 = smul.addr %s1163, 16
        %s1165 = scalar_lea.vmem [#allocation16], %s1164
        // Predicated region
        $region97: #{tpu_custom_call.1} parent=63 // pred_check
          %p1166 = pneg %p313
        $region98: #{tpu_custom_call.1} parent=63 // pred_check_branch
          %1168 = sbr.rel (%p1166) target = $region100
        $region99: #{tpu_custom_call.1} parent=63 // pred_region
          %s1169 = smul.u32 2, %s38
          %1171 = vsyncadd %s1162, 0
          %s1172 = smul.addr %s37, 2
          %s1173 = sadd.s32 %s1169, %s1172
          %s1174 = smul.addr %s1173, 8
          %s1175 = scalar_lea.hbm %s11, %s1174
          %s1176 = sshll.u32 %s1165, 4
          %s1177 = int_to_ptr.vmem [resolvable:$true] %s1176
          %s1178 = sshll.u32 %s1175, 4
          %s1179 = int_to_ptr.hbm [resolvable:$true] %s1178
          %1184 = dma.vmem_to_hbm [thread:$0]  %s1177, 256, %s1179, %s1162, 128, 128, 8
        $region100: #{tpu_custom_call.1} parent=63 // pred_fallthru
          _
      $region64: #{tpu_custom_call.1} parent=5 // pred_fallthru
        _
      %p1185 = scmp.le.s32.totalorder 2, %s28
      // Predicated region
      $region101: #{tpu_custom_call.1} parent=5 // pred_check
        %p1186 = pneg %p1185
      $region102: #{tpu_custom_call.1} parent=5 // pred_check_branch
        %1188 = sbr.rel (%p1186) target = $region104
      $region103: #{tpu_custom_call.1} parent=5 // pred_region
        %s1189 = ssub.s32 %s28, 2
        // Predicated region
        $region105: #{tpu_custom_call.1} parent=103 // pred_check
          %p1190 = pneg %p319
        $region106: #{tpu_custom_call.1} parent=103 // pred_check_branch
          %1192 = sbr.rel (%p1190) target = $region108
        $region107: #{tpu_custom_call.1} parent=103 // pred_region
          %s1193 = sand.u32 %s304, 1
          %s1194 = scalar_lea.sflag [#allocation6], %s1193
          %s1195 = sand.u32 %s304, 1
          %s1196 = smul.addr %s1195, 16
          %s1197 = scalar_lea.vmem [#allocation16], %s1196
          %1199 = dma.done %s1194, 256
        $region108: #{tpu_custom_call.1} parent=103 // pred_fallthru
          _
      $region104: #{tpu_custom_call.1} parent=5 // pred_fallthru
        _
    $region6: #{tpu_custom_call.1} parent=1 // loop_footer
      %s32 = sadd.s32 1, %s28
    $region7: #{tpu_custom_call.1} parent=1 // loop_footer_branch
      %27 = sbr.rel target = $region3
    $region8: #{tpu_custom_call.1} parent=1 // loop_exit
      _
    %1200 = vsyncpa [#allocation5], 1
    %s1201 = scalar_lea.sflag [#allocation5], 1
    %1202 = vsyncpa %s1201, 1
    %1203 = vsyncpa [#allocation8], 1
    %s1204 = scalar_lea.sflag [#allocation8], 1
    %1205 = vsyncpa %s1204, 1
    %1206 = vsyncpa [#allocation11], 1
    %1207 = vsyncpa [#allocation14], 1
    %1208 = vsyncpa [#allocation6], 1
    %s1209 = scalar_lea.sflag [#allocation6], 1
    %1210 = vsyncpa %s1209, 1

</llo_original>
